<compile_context>
chip_gen: v5e
topology: v5e:2x2
jax: 0.10.0
libtpu: 0.0.40
codegen_flags: <defaults>
</compile_context>

<pallas_src>
import functools

import jax
import jax.numpy as jnp
from jax.experimental import pallas as pl
from jax.experimental.pallas import tpu as pltpu


HIDDEN = 500
HIDDEN_PAD = 512   # 4 x 128 lanes, MXU-aligned; padding is exact (zeros)


def mlp_kernel(x_ref, w1_ref, b1_ref, w2_ref, b2_ref, w3_ref, b3_ref, o_ref):
    def silu(h):
        # exp and reciprocal both run on the EUP slot (separate from VALU).
        return h * pl.reciprocal(1.0 + jnp.exp(-h), approx=True)

    # fc1 + SiLU  (bf16 MXU inputs, f32 accumulate, f32 elementwise)
    h = jnp.dot(x_ref[...].astype(jnp.bfloat16), w1_ref[...],
                preferred_element_type=jnp.float32) + b1_ref[...]
    h = silu(h)
    # fc2 + SiLU
    h = jnp.dot(h.astype(jnp.bfloat16), w2_ref[...],
                preferred_element_type=jnp.float32) + b2_ref[...]
    h = silu(h)
    # fc3
    out = jnp.dot(h.astype(jnp.bfloat16), w3_ref[...],
                  preferred_element_type=jnp.float32) + b3_ref[...]
    # out[:, 4:8] = exp(out[:, 4:8])
    # exp is evaluated on all lanes then where-selected (NOT a mask-multiply),
    # so a large value in the discarded mean columns cannot poison the output.
    col = jax.lax.broadcasted_iota(jnp.int32, out.shape, dimension=1)
    out = jnp.where((col >= 4) & (col < 8), jnp.exp(out), out)
    o_ref[...] = out.astype(o_ref.dtype)


def p_forward(x, params, *, num_cores=1, max_tile=1024):
    """x: (B, input_dims) f32.  params: padded (w1, b1, w2, b2, w3, b3).

    num_cores=1 for v5e/v6e (single TensorCore -> single grid step);
    num_cores=2 on v7x splits the batch across both TensorCores (CORE_PARALLEL).
    """
    w1, b1, w2, b2, w3, b3 = params
    B, in_dims = x.shape
    out_dims = w3.shape[1]

    # Pick batch tiling: one tile (no pipelining churn) whenever it fits.
    if num_cores == 1 and B <= max_tile:
        batch_tile, n_tiles, B_pad = B, 1, B
    else:
        per_core = -(-B // num_cores)                       # ceil(B / num_cores)
        batch_tile = min(max_tile, ((per_core + 7) // 8) * 8)
        n_tiles = pl.cdiv(B, batch_tile)
        B_pad = n_tiles * batch_tile

    # Pad the batch only when it does not tile evenly (static Python check).
    xp = x if B_pad == B else jnp.zeros((B_pad, in_dims), x.dtype).at[:B].set(x)

    # Whole-array VMEM residency for weights/biases: fetched once per call,
    # never re-DMA'd per grid step, never double-buffered.
    resident = pl.BlockSpec(memory_space=pltpu.MemorySpace.VMEM)

    if num_cores > 1:
        dim_sem = (pltpu.CORE_PARALLEL,)   # actually shards the grid across TCs
    else:
        dim_sem = ("arbitrary",)

    out = pl.pallas_call(
        mlp_kernel,
        out_shape=jax.ShapeDtypeStruct((B_pad, out_dims), jnp.float32),
        grid_spec=pltpu.PrefetchScalarGridSpec(
            num_scalar_prefetch=0,
            grid=(n_tiles,),
            in_specs=[
                pl.BlockSpec((batch_tile, in_dims), lambda i: (i, 0)),
                resident, resident,   # w1, b1
                resident, resident,   # w2, b2
                resident, resident,   # w3, b3
            ],
            out_specs=pl.BlockSpec((batch_tile, out_dims), lambda i: (i, 0)),
        ),
        compiler_params=pltpu.CompilerParams(dimension_semantics=dim_sem),
    )(xp, w1, b1, w2, b2, w3, b3)

    return out if B_pad == B else out[:B]


def init_params(key, input_dims, output_dims, hidden=HIDDEN):
    """nn.Linear-style init at the true shapes, hidden dim zero-padded to 512.

    Weights stored in bf16 (halves weight bytes, bf16-native MXU); biases kept
    f32 (added after the f32 accumulate)."""
    ks = jax.random.split(key, 6)

    def lin(kw, kb, fan_in, fan_out, fan_in_pad, fan_out_pad):
        bound = 1.0 / jnp.sqrt(float(fan_in))
        w = jax.random.uniform(kw, (fan_in, fan_out), jnp.float32, -bound, bound)
        b = jax.random.uniform(kb, (1, fan_out), jnp.float32, -bound, bound)
        w_pad = jnp.zeros((fan_in_pad, fan_out_pad), jnp.float32).at[:fan_in, :fan_out].set(w)
        b_pad = jnp.zeros((1, fan_out_pad), jnp.float32).at[:, :fan_out].set(b)
        return w_pad, b_pad

    w1, b1 = lin(ks[0], ks[1], input_dims, hidden, input_dims, HIDDEN_PAD)
    w2, b2 = lin(ks[2], ks[3], hidden, hidden, HIDDEN_PAD, HIDDEN_PAD)
    w3, b3 = lin(ks[4], ks[5], hidden, output_dims, HIDDEN_PAD, output_dims)
    return (w1.astype(jnp.bfloat16), b1,
            w2.astype(jnp.bfloat16), b2,
            w3.astype(jnp.bfloat16), b3)


def p_forward_reference(x, params):
    """Pure-JAX reference mirroring the kernel numerics (bf16 dot inputs,
    f32 accumulation, f32 elementwise; exact sigmoid)."""
    w1, b1, w2, b2, w3, b3 = params

    def mm(a, w):
        return jnp.dot(a.astype(jnp.bfloat16), w, preferred_element_type=jnp.float32)

    h = mm(x, w1) + b1
    h = h * jax.nn.sigmoid(h)
    h = mm(h, w2) + b2
    h = h * jax.nn.sigmoid(h)
    out = mm(h, w3) + b3
    out = out.at[:, 4:8].set(jnp.exp(out[:, 4:8]))
    return out


if __name__ == "__main__":
    # state(4) + action(1) -> 5 input dims; 4 means + 4 variances -> 8 outputs.
    batch, input_dims, output_dims = 64, 5, 8

    key = jax.random.PRNGKey(0)
    k_param, k_x = jax.random.split(key)
    params = init_params(k_param, input_dims, output_dims)
    x = jax.random.normal(k_x, (batch, input_dims), jnp.float32)

    fwd = jax.jit(functools.partial(p_forward, num_cores=1))
    out = jax.block_until_ready(fwd(x, params))
    ref = p_forward_reference(x, params)

    assert out.shape == (batch, output_dims), out.shape
    assert jnp.allclose(out, ref, rtol=5e-3, atol=5e-3), \
        float(jnp.max(jnp.abs(out - ref)))
    print("KERNEL_OK")
</pallas_src>

<mosaic_0001>
module attributes {stable_mosaic.version = 11 : i64} {
  func.func @mlp_kernel(%arg0: i32, %arg1: memref<64x5xf32, #tpu.memory_space<vmem>>, %arg2: memref<5x512xbf16, #tpu.memory_space<vmem>>, %arg3: memref<1x512xf32, #tpu.memory_space<vmem>>, %arg4: memref<512x512xbf16, #tpu.memory_space<vmem>>, %arg5: memref<1x512xf32, #tpu.memory_space<vmem>>, %arg6: memref<512x8xbf16, #tpu.memory_space<vmem>>, %arg7: memref<1x8xf32, #tpu.memory_space<vmem>>, %arg8: memref<64x8xf32, #tpu.memory_space<vmem>>) attributes {dimension_semantics = [#tpu.dimension_semantics<arbitrary>], iteration_bounds = array<i64: 1>, scalar_prefetch = 0 : i64, scratch_operands = 0 : i64, tpu.core_type = #tpu.core_type<tc>, window_params = [{transform_indices = @transform_0, window_bounds = array<i64: 64, 5>}, {pipeline_mode = #tpu.pipeline_mode<synchronous>, transform_indices = @transform_1, window_bounds = array<i64: 5, 512>}, {pipeline_mode = #tpu.pipeline_mode<synchronous>, transform_indices = @transform_2, window_bounds = array<i64: 1, 512>}, {pipeline_mode = #tpu.pipeline_mode<synchronous>, transform_indices = @transform_3, window_bounds = array<i64: 512, 512>}, {pipeline_mode = #tpu.pipeline_mode<synchronous>, transform_indices = @transform_4, window_bounds = array<i64: 1, 512>}, {pipeline_mode = #tpu.pipeline_mode<synchronous>, transform_indices = @transform_5, window_bounds = array<i64: 512, 8>}, {pipeline_mode = #tpu.pipeline_mode<synchronous>, transform_indices = @transform_6, window_bounds = array<i64: 1, 8>}, {transform_indices = @transform_7, window_bounds = array<i64: 64, 8>}]} {
    %c0 = arith.constant 0 : index
    %c0_0 = arith.constant 0 : index
    %0 = vector.load %arg1[%c0, %c0_0] : memref<64x5xf32, #tpu.memory_space<vmem>>, vector<64x5xf32>
    %1 = arith.truncf %0 : vector<64x5xf32> to vector<64x5xbf16>
    %c0_1 = arith.constant 0 : index
    %c0_2 = arith.constant 0 : index
    %2 = vector.load %arg2[%c0_1, %c0_2] : memref<5x512xbf16, #tpu.memory_space<vmem>>, vector<5x512xbf16>
    %cst = arith.constant dense<0.000000e+00> : vector<64x512xf32>
    %3 = tpu.matmul %1, %2, %cst {dimension_numbers = #tpu.dot_dimension_numbers<[1], [0], [0], [1], [0, 0, 1, 1], [], []>} : vector<64x5xbf16>, vector<5x512xbf16>, vector<64x512xf32> -> vector<64x512xf32>
    %c0_3 = arith.constant 0 : index
    %c0_4 = arith.constant 0 : index
    %4 = vector.load %arg3[%c0_3, %c0_4] : memref<1x512xf32, #tpu.memory_space<vmem>>, vector<1x512xf32>
    %5 = vector.broadcast %4 : vector<1x512xf32> to vector<64x512xf32>
    %6 = arith.addf %3, %5 : vector<64x512xf32>
    %cst_5 = arith.constant 0.000000e+00 : f32
    %7 = vector.broadcast %cst_5 : f32 to vector<64x512xf32>
    %8 = arith.subf %7, %6 : vector<64x512xf32>
    %9 = math.exp %8 : vector<64x512xf32>
    %cst_6 = arith.constant 1.000000e+00 : f32
    %10 = vector.broadcast %cst_6 : f32 to vector<64x512xf32>
    %11 = arith.addf %10, %9 : vector<64x512xf32>
    %12 = tpu.reciprocal %11 {approx = true} : vector<64x512xf32> -> vector<64x512xf32>
    %13 = arith.mulf %6, %12 : vector<64x512xf32>
    %14 = arith.truncf %13 : vector<64x512xf32> to vector<64x512xbf16>
    %c0_7 = arith.constant 0 : index
    %c0_8 = arith.constant 0 : index
    %15 = vector.load %arg4[%c0_7, %c0_8] : memref<512x512xbf16, #tpu.memory_space<vmem>>, vector<512x512xbf16>
    %cst_9 = arith.constant dense<0.000000e+00> : vector<64x512xf32>
    %16 = tpu.matmul %14, %15, %cst_9 {dimension_numbers = #tpu.dot_dimension_numbers<[1], [0], [0], [1], [0, 0, 1, 1], [], []>} : vector<64x512xbf16>, vector<512x512xbf16>, vector<64x512xf32> -> vector<64x512xf32>
    %c0_10 = arith.constant 0 : index
    %c0_11 = arith.constant 0 : index
    %17 = vector.load %arg5[%c0_10, %c0_11] : memref<1x512xf32, #tpu.memory_space<vmem>>, vector<1x512xf32>
    %18 = vector.broadcast %17 : vector<1x512xf32> to vector<64x512xf32>
    %19 = arith.addf %16, %18 : vector<64x512xf32>
    %cst_12 = arith.constant 0.000000e+00 : f32
    %20 = vector.broadcast %cst_12 : f32 to vector<64x512xf32>
    %21 = arith.subf %20, %19 : vector<64x512xf32>
    %22 = math.exp %21 : vector<64x512xf32>
    %cst_13 = arith.constant 1.000000e+00 : f32
    %23 = vector.broadcast %cst_13 : f32 to vector<64x512xf32>
    %24 = arith.addf %23, %22 : vector<64x512xf32>
    %25 = tpu.reciprocal %24 {approx = true} : vector<64x512xf32> -> vector<64x512xf32>
    %26 = arith.mulf %19, %25 : vector<64x512xf32>
    %27 = arith.truncf %26 : vector<64x512xf32> to vector<64x512xbf16>
    %c0_14 = arith.constant 0 : index
    %c0_15 = arith.constant 0 : index
    %28 = vector.load %arg6[%c0_14, %c0_15] : memref<512x8xbf16, #tpu.memory_space<vmem>>, vector<512x8xbf16>
    %cst_16 = arith.constant dense<0.000000e+00> : vector<64x8xf32>
    %29 = tpu.matmul %27, %28, %cst_16 {dimension_numbers = #tpu.dot_dimension_numbers<[1], [0], [0], [1], [0, 0, 1, 1], [], []>} : vector<64x512xbf16>, vector<512x8xbf16>, vector<64x8xf32> -> vector<64x8xf32>
    %c0_17 = arith.constant 0 : index
    %c0_18 = arith.constant 0 : index
    %30 = vector.load %arg7[%c0_17, %c0_18] : memref<1x8xf32, #tpu.memory_space<vmem>>, vector<1x8xf32>
    %31 = vector.broadcast %30 : vector<1x8xf32> to vector<64x8xf32>
    %32 = arith.addf %29, %31 : vector<64x8xf32>
    %33 = tpu.iota {dimensions = array<i32: 1>} : vector<64x8xi32>
    %c4_i32 = arith.constant 4 : i32
    %34 = vector.broadcast %c4_i32 : i32 to vector<64x8xi32>
    %35 = arith.cmpi sge, %33, %34 : vector<64x8xi32>
    %c8_i32 = arith.constant 8 : i32
    %36 = vector.broadcast %c8_i32 : i32 to vector<64x8xi32>
    %37 = arith.cmpi slt, %33, %36 : vector<64x8xi32>
    %38 = arith.andi %35, %37 : vector<64x8xi1>
    %39 = math.exp %32 : vector<64x8xf32>
    %40 = arith.select %38, %39, %32 : vector<64x8xi1>, vector<64x8xf32>
    %c0_19 = arith.constant 0 : index
    %c0_20 = arith.constant 0 : index
    %41 = vector.load %arg8[%c0_19, %c0_20] : memref<64x8xf32, #tpu.memory_space<vmem>>, vector<64x8xf32>
    tpu.vector_store %arg8[%c0_19, %c0_20], %40 {strides = array<i32>} : memref<64x8xf32, #tpu.memory_space<vmem>>, vector<64x8xf32>,
    return
  }
  func.func @transform_0(%arg0: i32) -> (i32, i32) {
    %c0_i32 = arith.constant 0 : i32
    %c0_i32_0 = arith.constant 0 : i32
    return %arg0, %c0_i32 : i32, i32
  }
  func.func @transform_1(%arg0: i32) -> (i32, i32) {
    %c0_i32 = arith.constant 0 : i32
    %c0_i32_0 = arith.constant 0 : i32
    %c0_i32_1 = arith.constant 0 : i32
    return %c0_i32, %c0_i32_0 : i32, i32
  }
  func.func @transform_2(%arg0: i32) -> (i32, i32) {
    %c0_i32 = arith.constant 0 : i32
    %c0_i32_0 = arith.constant 0 : i32
    %c0_i32_1 = arith.constant 0 : i32
    return %c0_i32, %c0_i32_0 : i32, i32
  }
  func.func @transform_3(%arg0: i32) -> (i32, i32) {
    %c0_i32 = arith.constant 0 : i32
    %c0_i32_0 = arith.constant 0 : i32
    %c0_i32_1 = arith.constant 0 : i32
    return %c0_i32, %c0_i32_0 : i32, i32
  }
  func.func @transform_4(%arg0: i32) -> (i32, i32) {
    %c0_i32 = arith.constant 0 : i32
    %c0_i32_0 = arith.constant 0 : i32
    %c0_i32_1 = arith.constant 0 : i32
    return %c0_i32, %c0_i32_0 : i32, i32
  }
  func.func @transform_5(%arg0: i32) -> (i32, i32) {
    %c0_i32 = arith.constant 0 : i32
    %c0_i32_0 = arith.constant 0 : i32
    %c0_i32_1 = arith.constant 0 : i32
    return %c0_i32, %c0_i32_0 : i32, i32
  }
  func.func @transform_6(%arg0: i32) -> (i32, i32) {
    %c0_i32 = arith.constant 0 : i32
    %c0_i32_0 = arith.constant 0 : i32
    %c0_i32_1 = arith.constant 0 : i32
    return %c0_i32, %c0_i32_0 : i32, i32
  }
  func.func @transform_7(%arg0: i32) -> (i32, i32) {
    %c0_i32 = arith.constant 0 : i32
    %c0_i32_0 = arith.constant 0 : i32
    return %arg0, %c0_i32 : i32, i32
  }
}

</mosaic_0001>

<llo_original>
// kernel: p_forward.1
$region0: #{p_forward.1}
  #allocation0 [shape = 'u32[]', space=smem, size = 0x4, offset = 0x4, fixed_abs, tag = 'smem constant byte address 0x4 - core index']
  #allocation1 [shape = 'u32[72,128]{1,0:T(1,128)}', space=vmem, size = 0x9000, scoped, tag = 'internal scratch']
  %s0 = inlined_call_operand.vmem [shape: f32[64,5], index: 0, kind: input, shape index: {}]
  %s1 = inlined_call_operand.vmem [shape: bf16[5,512], index: 1, kind: input, shape index: {}]
  %s2 = inlined_call_operand.vmem [shape: f32[1,512], index: 2, kind: input, shape index: {}]
  %s3 = inlined_call_operand.hbm [shape: bf16[512,512], index: 3, kind: input, shape index: {}]
  %s4 = inlined_call_operand.vmem [shape: f32[1,512], index: 4, kind: input, shape index: {}]
  %s5 = inlined_call_operand.vmem [shape: bf16[512,8], index: 5, kind: input, shape index: {}]
  %s6 = inlined_call_operand.vmem [shape: f32[1,8], index: 6, kind: input, shape index: {}]
  %s7 = inlined_call_operand.vmem [shape: f32[64,8], index: 7, kind: output, shape index: {}]
  %s8 = sld [smem:[#allocation0]]
  $region42: #{p_forward.1} parent=0
    _
  %s10 = ssub.s32 1, %s8
  %s11 = scalar_select 0, %s10, %s8
  $region1: #{p_forward.1} parent=0
    #allocation2 [shape = 'u8[524288]{0}', space=vmem, size = 0x80000, scoped, tag = 'input window, operand 3, single buffered']
    #allocation3 [shape = 's32[1]{0}', space=sflag, size = 0x4, scoped, tag = 'scoped memory for p_forward.1']
    %12 = vsyncpa [#allocation3], 0
    // Predicated region
    $region2: #{p_forward.1} parent=1 // pred_check
      _
    $region3: #{p_forward.1} parent=1 // pred_check_branch
      %14 = sbr.rel (0) target = $region5
    $region4: #{p_forward.1} parent=1 // pred_region
      _
    $region5: #{p_forward.1} parent=1 // pred_fallthru
      _
    // Predicated region
    $region6: #{p_forward.1} parent=1 // pred_check
      _
    $region7: #{p_forward.1} parent=1 // pred_check_branch
      %16 = sbr.rel (0) target = $region9
    $region8: #{p_forward.1} parent=1 // pred_region
      _
    $region9: #{p_forward.1} parent=1 // pred_fallthru
      _
    // Predicated region
    $region10: #{p_forward.1} parent=1 // pred_check
      _
    $region11: #{p_forward.1} parent=1 // pred_check_branch
      %18 = sbr.rel (0) target = $region13
    $region12: #{p_forward.1} parent=1 // pred_region
      _
    $region13: #{p_forward.1} parent=1 // pred_fallthru
      _
    // Predicated region
    $region14: #{p_forward.1} parent=1 // pred_check
      _
    $region15: #{p_forward.1} parent=1 // pred_check_branch
      %20 = sbr.rel (0) target = $region17
    $region16: #{p_forward.1} parent=1 // pred_region
      %22 = vsyncadd [#allocation3], 0
      %s23 = sshll.u32 %s3, 4
      %s24 = int_to_ptr.hbm [resolvable:$true] %s23
      %s25 = sshll.u32 [#allocation2], 4
      %s26 = int_to_ptr.vmem [resolvable:$true] %s25
      %31 = dma.hbm_to_vmem [thread:$0]  %s24, 16384, %s26, [#allocation3], 256, 256, 16
    $region17: #{p_forward.1} parent=1 // pred_fallthru
      _
    // Predicated region
    $region18: #{p_forward.1} parent=1 // pred_check
      _
    $region19: #{p_forward.1} parent=1 // pred_check_branch
      %33 = sbr.rel (0) target = $region21
    $region20: #{p_forward.1} parent=1 // pred_region
      _
    $region21: #{p_forward.1} parent=1 // pred_fallthru
      _
    // Predicated region
    $region22: #{p_forward.1} parent=1 // pred_check
      _
    $region23: #{p_forward.1} parent=1 // pred_check_branch
      %35 = sbr.rel (0) target = $region25
    $region24: #{p_forward.1} parent=1 // pred_region
      _
    $region25: #{p_forward.1} parent=1 // pred_fallthru
      _
    // Predicated region
    $region26: #{p_forward.1} parent=1 // pred_check
      _
    $region27: #{p_forward.1} parent=1 // pred_check_branch
      %37 = sbr.rel (0) target = $region29
    $region28: #{p_forward.1} parent=1 // pred_region
      _
    $region29: #{p_forward.1} parent=1 // pred_fallthru
      _
    // Predicated region
    $region30: #{p_forward.1} parent=1 // pred_check
      _
    $region31: #{p_forward.1} parent=1 // pred_check_branch
      %39 = sbr.rel (0) target = $region33
    $region32: #{p_forward.1} parent=1 // pred_region
      %41 = dma.done [#allocation3], 16384
    $region33: #{p_forward.1} parent=1 // pred_fallthru
      _
    %v43 = vld [vmem:[%s0] sm:$0xff]
    %v44 = vld [vmem:[%s0 + $0x8] sm:$0xff]
    %v45 = vld [vmem:[%s0 + $0x10] sm:$0xff]
    %v46 = vld [vmem:[%s0 + $0x18] sm:$0xff]
    %v47 = vld [vmem:[%s0 + $0x20] sm:$0xff]
    %v48 = vld [vmem:[%s0 + $0x28] sm:$0xff]
    %v49 = vld [vmem:[%s0 + $0x30] sm:$0xff]
    %v50 = vld [vmem:[%s0 + $0x38] sm:$0xff]
    %v51 = vpack.c.bf16 %v44, %v43
    %v52 = vpack.c.bf16 %v46, %v45
    %v53 = vpack.c.bf16 %v48, %v47
    %v54 = vpack.c.bf16 %v50, %v49
    %v55 = vld [vmem:[%s1] sm:$0x77]
    %v56 = vld [vmem:[%s1 + $0x8] sm:$0x77]
    %v57 = vld [vmem:[%s2] sm:$0xf]
    %v59 = vperm.slane %v57, 0
    %v60 = vperm.slane %v57, 1
    %v61 = vperm.slane %v57, 2
    %v62 = vperm.slane %v57, 3
    %v69 = vunpack.c.l.b16 %v55
    %v70 = vunpack.c.h.b16 %v55
    %v71 = vunpack.c.l.b16 %v56
    %v72 = vunpack.c.h.b16 %v56
    %v73 = vpack.c.b16 %v69, %v69
    %v74 = vpack.c.b16 %v70, %v70
    %v75 = vpack.c.b16 %v71, %v71
    %v76 = vpack.c.b16 %v72, %v72
    %vm77 = vcmask 39936
    %v79 = vsel %vm77, %v51, 0
    %v82 = vsel %vm77, %v52, 0
    %v85 = vsel %vm77, %v53, 0
    %v88 = vsel %vm77, %v54, 0
    %vm90 = vcmask 1041408
    %vm91 = vcmask 1042432
    %v92 = vsel %vm90, 4294967295, 65535
    %v93 = vsel %vm91, %v92, 0
    %v95 = vand.u32 %v73, %v93
    %v98 = vand.u32 %v74, %v93
    %v101 = vand.u32 %v75, %v93
    %v104 = vand.u32 %v76, %v93
    %106 = vmatpush.bf16.msra.mxu0 0
    %107 = vmatpush.bf16.msra.mxu0 0
    %108 = vmatpush.bf16.msra.mxu0 0
    %109 = vmatpush.bf16.msra.mxu0 0
    %110 = vmatpush.bf16.msra.mxu0 0
    %111 = vmatpush.bf16.msra.mxu0 0
    %112 = vmatpush.bf16.msra.mxu0 0
    %113 = vmatpush.bf16.msra.mxu0 %v95
    %114 = vmatmul.bf16.gmra.mxu0 %v79
    %v115 = vpop.f32.mrf.mxu0
    %v116 = vadd.f32 %v59, %v115
    %v117 = vpop.f32.mrf.mxu0
    %v118 = vadd.f32 %v59, %v117
    %119 = vmatmul.bf16.gmra.mxu0 %v82
    %v120 = vpop.f32.mrf.mxu0
    %v121 = vadd.f32 %v59, %v120
    %v122 = vpop.f32.mrf.mxu0
    %v123 = vadd.f32 %v59, %v122
    %124 = vmatmul.bf16.gmra.mxu0 %v85
    %v125 = vpop.f32.mrf.mxu0
    %v126 = vadd.f32 %v59, %v125
    %v127 = vpop.f32.mrf.mxu0
    %v128 = vadd.f32 %v59, %v127
    %129 = vmatmul.bf16.gmra.mxu0 %v88
    %v130 = vpop.f32.mrf.mxu0
    %v131 = vadd.f32 %v59, %v130
    %v132 = vpop.f32.mrf.mxu0
    %v133 = vadd.f32 %v59, %v132
    %134 = vdwg.mxu0
    %135 = vmatpush.bf16.msra.mxu0 0
    %136 = vmatpush.bf16.msra.mxu0 0
    %137 = vmatpush.bf16.msra.mxu0 0
    %138 = vmatpush.bf16.msra.mxu0 0
    %139 = vmatpush.bf16.msra.mxu0 0
    %140 = vmatpush.bf16.msra.mxu0 0
    %141 = vmatpush.bf16.msra.mxu0 0
    %142 = vmatpush.bf16.msra.mxu0 %v98
    %143 = vmatmul.bf16.gmra.mxu0 %v79
    %v144 = vpop.f32.mrf.mxu0
    %v145 = vadd.f32 %v60, %v144
    %v146 = vpop.f32.mrf.mxu0
    %v147 = vadd.f32 %v60, %v146
    %148 = vmatmul.bf16.gmra.mxu0 %v82
    %v149 = vpop.f32.mrf.mxu0
    %v150 = vadd.f32 %v60, %v149
    %v151 = vpop.f32.mrf.mxu0
    %v152 = vadd.f32 %v60, %v151
    %153 = vmatmul.bf16.gmra.mxu0 %v85
    %v154 = vpop.f32.mrf.mxu0
    %v155 = vadd.f32 %v60, %v154
    %v156 = vpop.f32.mrf.mxu0
    %v157 = vadd.f32 %v60, %v156
    %158 = vmatmul.bf16.gmra.mxu0 %v88
    %v159 = vpop.f32.mrf.mxu0
    %v160 = vadd.f32 %v60, %v159
    %v161 = vpop.f32.mrf.mxu0
    %v162 = vadd.f32 %v60, %v161
    %163 = vdwg.mxu0
    %164 = vmatpush.bf16.msra.mxu0 0
    %165 = vmatpush.bf16.msra.mxu0 0
    %166 = vmatpush.bf16.msra.mxu0 0
    %167 = vmatpush.bf16.msra.mxu0 0
    %168 = vmatpush.bf16.msra.mxu0 0
    %169 = vmatpush.bf16.msra.mxu0 0
    %170 = vmatpush.bf16.msra.mxu0 0
    %171 = vmatpush.bf16.msra.mxu0 %v101
    %172 = vmatmul.bf16.gmra.mxu0 %v79
    %v173 = vpop.f32.mrf.mxu0
    %v174 = vadd.f32 %v61, %v173
    %v175 = vpop.f32.mrf.mxu0
    %v176 = vadd.f32 %v61, %v175
    %177 = vmatmul.bf16.gmra.mxu0 %v82
    %v178 = vpop.f32.mrf.mxu0
    %v179 = vadd.f32 %v61, %v178
    %v180 = vpop.f32.mrf.mxu0
    %v181 = vadd.f32 %v61, %v180
    %182 = vmatmul.bf16.gmra.mxu0 %v85
    %v183 = vpop.f32.mrf.mxu0
    %v184 = vadd.f32 %v61, %v183
    %v185 = vpop.f32.mrf.mxu0
    %v186 = vadd.f32 %v61, %v185
    %187 = vmatmul.bf16.gmra.mxu0 %v88
    %v188 = vpop.f32.mrf.mxu0
    %v189 = vadd.f32 %v61, %v188
    %v190 = vpop.f32.mrf.mxu0
    %v191 = vadd.f32 %v61, %v190
    %192 = vdwg.mxu0
    %193 = vmatpush.bf16.msra.mxu0 0
    %194 = vmatpush.bf16.msra.mxu0 0
    %195 = vmatpush.bf16.msra.mxu0 0
    %196 = vmatpush.bf16.msra.mxu0 0
    %197 = vmatpush.bf16.msra.mxu0 0
    %198 = vmatpush.bf16.msra.mxu0 0
    %199 = vmatpush.bf16.msra.mxu0 0
    %200 = vmatpush.bf16.msra.mxu0 %v104
    %201 = vmatmul.bf16.gmra.mxu0 %v79
    %v202 = vpop.f32.mrf.mxu0
    %v203 = vadd.f32 %v62, %v202
    %v204 = vpop.f32.mrf.mxu0
    %v205 = vadd.f32 %v62, %v204
    %206 = vmatmul.bf16.gmra.mxu0 %v82
    %v207 = vpop.f32.mrf.mxu0
    %v208 = vadd.f32 %v62, %v207
    %v209 = vpop.f32.mrf.mxu0
    %v210 = vadd.f32 %v62, %v209
    %211 = vmatmul.bf16.gmra.mxu0 %v85
    %v212 = vpop.f32.mrf.mxu0
    %v213 = vadd.f32 %v62, %v212
    %v214 = vpop.f32.mrf.mxu0
    %v215 = vadd.f32 %v62, %v214
    %216 = vmatmul.bf16.gmra.mxu0 %v88
    %v217 = vpop.f32.mrf.mxu0
    %v218 = vadd.f32 %v62, %v217
    %v219 = vpop.f32.mrf.mxu0
    %v220 = vadd.f32 %v62, %v219
    %221 = vdwg.mxu0
    %v222 = vsub.f32 0.0, %v116
    %v223 = vsub.f32 0.0, %v145
    %v224 = vsub.f32 0.0, %v174
    %v225 = vsub.f32 0.0, %v203
    %v226 = vsub.f32 0.0, %v118
    %v227 = vsub.f32 0.0, %v147
    %v228 = vsub.f32 0.0, %v176
    %v229 = vsub.f32 0.0, %v205
    %v230 = vsub.f32 0.0, %v121
    %v231 = vsub.f32 0.0, %v150
    %v232 = vsub.f32 0.0, %v179
    %v233 = vsub.f32 0.0, %v208
    %v234 = vsub.f32 0.0, %v123
    %v235 = vsub.f32 0.0, %v152
    %v236 = vsub.f32 0.0, %v181
    %v237 = vsub.f32 0.0, %v210
    %v238 = vsub.f32 0.0, %v126
    %v239 = vsub.f32 0.0, %v155
    %v240 = vsub.f32 0.0, %v184
    %v241 = vsub.f32 0.0, %v213
    %v242 = vsub.f32 0.0, %v128
    %v243 = vsub.f32 0.0, %v157
    %v244 = vsub.f32 0.0, %v186
    %v245 = vsub.f32 0.0, %v215
    %v246 = vsub.f32 0.0, %v131
    %v247 = vsub.f32 0.0, %v160
    %v248 = vsub.f32 0.0, %v189
    %v249 = vsub.f32 0.0, %v218
    %v250 = vsub.f32 0.0, %v133
    %v251 = vsub.f32 0.0, %v162
    %v252 = vsub.f32 0.0, %v191
    %v253 = vsub.f32 0.0, %v220
    %v254 = vmul.f32 %v222, 1.442695
    %v255 = vpow.pop %v254
    %v256 = vmul.f32 %v223, 1.442695
    %v257 = vpow.pop %v256
    %v258 = vmul.f32 %v224, 1.442695
    %v259 = vpow.pop %v258
    %v260 = vmul.f32 %v225, 1.442695
    %v261 = vpow.pop %v260
    %v262 = vmul.f32 %v226, 1.442695
    %v263 = vpow.pop %v262
    %v264 = vmul.f32 %v227, 1.442695
    %v265 = vpow.pop %v264
    %v266 = vmul.f32 %v228, 1.442695
    %v267 = vpow.pop %v266
    %v268 = vmul.f32 %v229, 1.442695
    %v269 = vpow.pop %v268
    %v270 = vmul.f32 %v230, 1.442695
    %v271 = vpow.pop %v270
    %v272 = vmul.f32 %v231, 1.442695
    %v273 = vpow.pop %v272
    %v274 = vmul.f32 %v232, 1.442695
    %v275 = vpow.pop %v274
    %v276 = vmul.f32 %v233, 1.442695
    %v277 = vpow.pop %v276
    %v278 = vmul.f32 %v234, 1.442695
    %v279 = vpow.pop %v278
    %v280 = vmul.f32 %v235, 1.442695
    %v281 = vpow.pop %v280
    %v282 = vmul.f32 %v236, 1.442695
    %v283 = vpow.pop %v282
    %v284 = vmul.f32 %v237, 1.442695
    %v285 = vpow.pop %v284
    %v286 = vmul.f32 %v238, 1.442695
    %v287 = vpow.pop %v286
    %v288 = vmul.f32 %v239, 1.442695
    %v289 = vpow.pop %v288
    %v290 = vmul.f32 %v240, 1.442695
    %v291 = vpow.pop %v290
    %v292 = vmul.f32 %v241, 1.442695
    %v293 = vpow.pop %v292
    %v294 = vmul.f32 %v242, 1.442695
    %v295 = vpow.pop %v294
    %v296 = vmul.f32 %v243, 1.442695
    %v297 = vpow.pop %v296
    %v298 = vmul.f32 %v244, 1.442695
    %v299 = vpow.pop %v298
    %v300 = vmul.f32 %v245, 1.442695
    %v301 = vpow.pop %v300
    %v302 = vmul.f32 %v246, 1.442695
    %v303 = vpow.pop %v302
    %v304 = vmul.f32 %v247, 1.442695
    %v305 = vpow.pop %v304
    %v306 = vmul.f32 %v248, 1.442695
    %v307 = vpow.pop %v306
    %v308 = vmul.f32 %v249, 1.442695
    %v309 = vpow.pop %v308
    %v310 = vmul.f32 %v250, 1.442695
    %v311 = vpow.pop %v310
    %v312 = vmul.f32 %v251, 1.442695
    %v313 = vpow.pop %v312
    %v314 = vmul.f32 %v252, 1.442695
    %v315 = vpow.pop %v314
    %v316 = vmul.f32 %v253, 1.442695
    %v317 = vpow.pop %v316
    %v318 = vadd.f32 %v255, 1.0
    %v319 = vadd.f32 %v257, 1.0
    %v320 = vadd.f32 %v259, 1.0
    %v321 = vadd.f32 %v261, 1.0
    %v322 = vadd.f32 %v263, 1.0
    %v323 = vadd.f32 %v265, 1.0
    %v324 = vadd.f32 %v267, 1.0
    %v325 = vadd.f32 %v269, 1.0
    %v326 = vadd.f32 %v271, 1.0
    %v327 = vadd.f32 %v273, 1.0
    %v328 = vadd.f32 %v275, 1.0
    %v329 = vadd.f32 %v277, 1.0
    %v330 = vadd.f32 %v279, 1.0
    %v331 = vadd.f32 %v281, 1.0
    %v332 = vadd.f32 %v283, 1.0
    %v333 = vadd.f32 %v285, 1.0
    %v334 = vadd.f32 %v287, 1.0
    %v335 = vadd.f32 %v289, 1.0
    %v336 = vadd.f32 %v291, 1.0
    %v337 = vadd.f32 %v293, 1.0
    %v338 = vadd.f32 %v295, 1.0
    %v339 = vadd.f32 %v297, 1.0
    %v340 = vadd.f32 %v299, 1.0
    %v341 = vadd.f32 %v301, 1.0
    %v342 = vadd.f32 %v303, 1.0
    %v343 = vadd.f32 %v305, 1.0
    %v344 = vadd.f32 %v307, 1.0
    %v345 = vadd.f32 %v309, 1.0
    %v346 = vadd.f32 %v311, 1.0
    %v347 = vadd.f32 %v313, 1.0
    %v348 = vadd.f32 %v315, 1.0
    %v349 = vadd.f32 %v317, 1.0
    %v350 = vrcp.pop %v318
    %v351 = vrcp.pop %v319
    %v352 = vrcp.pop %v320
    %v353 = vrcp.pop %v321
    %v354 = vrcp.pop %v322
    %v355 = vrcp.pop %v323
    %v356 = vrcp.pop %v324
    %v357 = vrcp.pop %v325
    %v358 = vrcp.pop %v326
    %v359 = vrcp.pop %v327
    %v360 = vrcp.pop %v328
    %v361 = vrcp.pop %v329
    %v362 = vrcp.pop %v330
    %v363 = vrcp.pop %v331
    %v364 = vrcp.pop %v332
    %v365 = vrcp.pop %v333
    %v366 = vrcp.pop %v334
    %v367 = vrcp.pop %v335
    %v368 = vrcp.pop %v336
    %v369 = vrcp.pop %v337
    %v370 = vrcp.pop %v338
    %v371 = vrcp.pop %v339
    %v372 = vrcp.pop %v340
    %v373 = vrcp.pop %v341
    %v374 = vrcp.pop %v342
    %v375 = vrcp.pop %v343
    %v376 = vrcp.pop %v344
    %v377 = vrcp.pop %v345
    %v378 = vrcp.pop %v346
    %v379 = vrcp.pop %v347
    %v380 = vrcp.pop %v348
    %v381 = vrcp.pop %v349
    %v382 = vmul.f32 %v116, %v350
    %v383 = vmul.f32 %v145, %v351
    %v384 = vmul.f32 %v174, %v352
    %v385 = vmul.f32 %v203, %v353
    %v386 = vmul.f32 %v118, %v354
    %v387 = vmul.f32 %v147, %v355
    %v388 = vmul.f32 %v176, %v356
    %v389 = vmul.f32 %v205, %v357
    %v390 = vmul.f32 %v121, %v358
    %v391 = vmul.f32 %v150, %v359
    %v392 = vmul.f32 %v179, %v360
    %v393 = vmul.f32 %v208, %v361
    %v394 = vmul.f32 %v123, %v362
    %v395 = vmul.f32 %v152, %v363
    %v396 = vmul.f32 %v181, %v364
    %v397 = vmul.f32 %v210, %v365
    %v398 = vmul.f32 %v126, %v366
    %v399 = vmul.f32 %v155, %v367
    %v400 = vmul.f32 %v184, %v368
    %v401 = vmul.f32 %v213, %v369
    %v402 = vmul.f32 %v128, %v370
    %v403 = vmul.f32 %v157, %v371
    %v404 = vmul.f32 %v186, %v372
    %v405 = vmul.f32 %v215, %v373
    %v406 = vmul.f32 %v131, %v374
    %v407 = vmul.f32 %v160, %v375
    %v408 = vmul.f32 %v189, %v376
    %v409 = vmul.f32 %v218, %v377
    %v410 = vmul.f32 %v133, %v378
    %v411 = vmul.f32 %v162, %v379
    %v412 = vmul.f32 %v191, %v380
    %v413 = vmul.f32 %v220, %v381
    %v414 = vpack.c.bf16 %v386, %v382
    %v415 = vpack.c.bf16 %v387, %v383
    %v416 = vpack.c.bf16 %v388, %v384
    %v417 = vpack.c.bf16 %v389, %v385
    %v418 = vpack.c.bf16 %v394, %v390
    %v419 = vpack.c.bf16 %v395, %v391
    %v420 = vpack.c.bf16 %v396, %v392
    %v421 = vpack.c.bf16 %v397, %v393
    %v422 = vpack.c.bf16 %v402, %v398
    %v423 = vpack.c.bf16 %v403, %v399
    %v424 = vpack.c.bf16 %v404, %v400
    %v425 = vpack.c.bf16 %v405, %v401
    %v426 = vpack.c.bf16 %v410, %v406
    %v427 = vpack.c.bf16 %v411, %v407
    %v428 = vpack.c.bf16 %v412, %v408
    %v429 = vpack.c.bf16 %v413, %v409
    %v430 = vld [vmem:[#allocation2] sm:$0xff]
    %v431 = vld [vmem:[#allocation2 + $0x8] sm:$0xff]
    %v432 = vld [vmem:[#allocation2 + $0x10] sm:$0xff]
    %v433 = vld [vmem:[#allocation2 + $0x18] sm:$0xff]
    %v434 = vld [vmem:[#allocation2 + $0x20] sm:$0xff]
    %v435 = vld [vmem:[#allocation2 + $0x28] sm:$0xff]
    %v436 = vld [vmem:[#allocation2 + $0x30] sm:$0xff]
    %v437 = vld [vmem:[#allocation2 + $0x38] sm:$0xff]
    %v438 = vld [vmem:[#allocation2 + $0x40] sm:$0xff]
    %v439 = vld [vmem:[#allocation2 + $0x48] sm:$0xff]
    %v440 = vld [vmem:[#allocation2 + $0x50] sm:$0xff]
    %v441 = vld [vmem:[#allocation2 + $0x58] sm:$0xff]
    %v442 = vld [vmem:[#allocation2 + $0x60] sm:$0xff]
    %v443 = vld [vmem:[#allocation2 + $0x68] sm:$0xff]
    %v444 = vld [vmem:[#allocation2 + $0x70] sm:$0xff]
    %v445 = vld [vmem:[#allocation2 + $0x78] sm:$0xff]
    %v446 = vld [vmem:[#allocation2 + $0x80] sm:$0xff]
    %v447 = vld [vmem:[#allocation2 + $0x88] sm:$0xff]
    %v448 = vld [vmem:[#allocation2 + $0x90] sm:$0xff]
    %v449 = vld [vmem:[#allocation2 + $0x98] sm:$0xff]
    %v450 = vld [vmem:[#allocation2 + $0xa0] sm:$0xff]
    %v451 = vld [vmem:[#allocation2 + $0xa8] sm:$0xff]
    %v452 = vld [vmem:[#allocation2 + $0xb0] sm:$0xff]
    %v453 = vld [vmem:[#allocation2 + $0xb8] sm:$0xff]
    %v454 = vld [vmem:[#allocation2 + $0xc0] sm:$0xff]
    %v455 = vld [vmem:[#allocation2 + $0xc8] sm:$0xff]
    %v456 = vld [vmem:[#allocation2 + $0xd0] sm:$0xff]
    %v457 = vld [vmem:[#allocation2 + $0xd8] sm:$0xff]
    %v458 = vld [vmem:[#allocation2 + $0xe0] sm:$0xff]
    %v459 = vld [vmem:[#allocation2 + $0xe8] sm:$0xff]
    %v460 = vld [vmem:[#allocation2 + $0xf0] sm:$0xff]
    %v461 = vld [vmem:[#allocation2 + $0xf8] sm:$0xff]
    %v462 = vld [vmem:[#allocation2 + $0x100] sm:$0xff]
    %v463 = vld [vmem:[#allocation2 + $0x108] sm:$0xff]
    %v464 = vld [vmem:[#allocation2 + $0x110] sm:$0xff]
    %v465 = vld [vmem:[#allocation2 + $0x118] sm:$0xff]
    %v466 = vld [vmem:[#allocation2 + $0x120] sm:$0xff]
    %v467 = vld [vmem:[#allocation2 + $0x128] sm:$0xff]
    %v468 = vld [vmem:[#allocation2 + $0x130] sm:$0xff]
    %v469 = vld [vmem:[#allocation2 + $0x138] sm:$0xff]
    %v470 = vld [vmem:[#allocation2 + $0x140] sm:$0xff]
    %v471 = vld [vmem:[#allocation2 + $0x148] sm:$0xff]
    %v472 = vld [vmem:[#allocation2 + $0x150] sm:$0xff]
    %v473 = vld [vmem:[#allocation2 + $0x158] sm:$0xff]
    %v474 = vld [vmem:[#allocation2 + $0x160] sm:$0xff]
    %v475 = vld [vmem:[#allocation2 + $0x168] sm:$0xff]
    %v476 = vld [vmem:[#allocation2 + $0x170] sm:$0xff]
    %v477 = vld [vmem:[#allocation2 + $0x178] sm:$0xff]
    %v478 = vld [vmem:[#allocation2 + $0x180] sm:$0xff]
    %v479 = vld [vmem:[#allocation2 + $0x188] sm:$0xff]
    %v480 = vld [vmem:[#allocation2 + $0x190] sm:$0xff]
    %v481 = vld [vmem:[#allocation2 + $0x198] sm:$0xff]
    %v482 = vld [vmem:[#allocation2 + $0x1a0] sm:$0xff]
    %v483 = vld [vmem:[#allocation2 + $0x1a8] sm:$0xff]
    %v484 = vld [vmem:[#allocation2 + $0x1b0] sm:$0xff]
    %v485 = vld [vmem:[#allocation2 + $0x1b8] sm:$0xff]
    %v486 = vld [vmem:[#allocation2 + $0x1c0] sm:$0xff]
    %v487 = vld [vmem:[#allocation2 + $0x1c8] sm:$0xff]
    %v488 = vld [vmem:[#allocation2 + $0x1d0] sm:$0xff]
    %v489 = vld [vmem:[#allocation2 + $0x1d8] sm:$0xff]
    %v490 = vld [vmem:[#allocation2 + $0x1e0] sm:$0xff]
    %v491 = vld [vmem:[#allocation2 + $0x1e8] sm:$0xff]
    %v492 = vld [vmem:[#allocation2 + $0x1f0] sm:$0xff]
    %v493 = vld [vmem:[#allocation2 + $0x1f8] sm:$0xff]
    %v494 = vld [vmem:[#allocation2 + $0x200] sm:$0xff]
    %v495 = vld [vmem:[#allocation2 + $0x208] sm:$0xff]
    %v496 = vld [vmem:[#allocation2 + $0x210] sm:$0xff]
    %v497 = vld [vmem:[#allocation2 + $0x218] sm:$0xff]
    %v498 = vld [vmem:[#allocation2 + $0x220] sm:$0xff]
    %v499 = vld [vmem:[#allocation2 + $0x228] sm:$0xff]
    %v500 = vld [vmem:[#allocation2 + $0x230] sm:$0xff]
    %v501 = vld [vmem:[#allocation2 + $0x238] sm:$0xff]
    %v502 = vld [vmem:[#allocation2 + $0x240] sm:$0xff]
    %v503 = vld [vmem:[#allocation2 + $0x248] sm:$0xff]
    %v504 = vld [vmem:[#allocation2 + $0x250] sm:$0xff]
    %v505 = vld [vmem:[#allocation2 + $0x258] sm:$0xff]
    %v506 = vld [vmem:[#allocation2 + $0x260] sm:$0xff]
    %v507 = vld [vmem:[#allocation2 + $0x268] sm:$0xff]
    %v508 = vld [vmem:[#allocation2 + $0x270] sm:$0xff]
    %v509 = vld [vmem:[#allocation2 + $0x278] sm:$0xff]
    %v510 = vld [vmem:[#allocation2 + $0x280] sm:$0xff]
    %v511 = vld [vmem:[#allocation2 + $0x288] sm:$0xff]
    %v512 = vld [vmem:[#allocation2 + $0x290] sm:$0xff]
    %v513 = vld [vmem:[#allocation2 + $0x298] sm:$0xff]
    %v514 = vld [vmem:[#allocation2 + $0x2a0] sm:$0xff]
    %v515 = vld [vmem:[#allocation2 + $0x2a8] sm:$0xff]
    %v516 = vld [vmem:[#allocation2 + $0x2b0] sm:$0xff]
    %v517 = vld [vmem:[#allocation2 + $0x2b8] sm:$0xff]
    %v518 = vld [vmem:[#allocation2 + $0x2c0] sm:$0xff]
    %v519 = vld [vmem:[#allocation2 + $0x2c8] sm:$0xff]
    %v520 = vld [vmem:[#allocation2 + $0x2d0] sm:$0xff]
    %v521 = vld [vmem:[#allocation2 + $0x2d8] sm:$0xff]
    %v522 = vld [vmem:[#allocation2 + $0x2e0] sm:$0xff]
    %v523 = vld [vmem:[#allocation2 + $0x2e8] sm:$0xff]
    %v524 = vld [vmem:[#allocation2 + $0x2f0] sm:$0xff]
    %v525 = vld [vmem:[#allocation2 + $0x2f8] sm:$0xff]
    %v526 = vld [vmem:[#allocation2 + $0x300] sm:$0xff]
    %v527 = vld [vmem:[#allocation2 + $0x308] sm:$0xff]
    %v528 = vld [vmem:[#allocation2 + $0x310] sm:$0xff]
    %v529 = vld [vmem:[#allocation2 + $0x318] sm:$0xff]
    %v530 = vld [vmem:[#allocation2 + $0x320] sm:$0xff]
    %v531 = vld [vmem:[#allocation2 + $0x328] sm:$0xff]
    %v532 = vld [vmem:[#allocation2 + $0x330] sm:$0xff]
    %v533 = vld [vmem:[#allocation2 + $0x338] sm:$0xff]
    %v534 = vld [vmem:[#allocation2 + $0x340] sm:$0xff]
    %v535 = vld [vmem:[#allocation2 + $0x348] sm:$0xff]
    %v536 = vld [vmem:[#allocation2 + $0x350] sm:$0xff]
    %v537 = vld [vmem:[#allocation2 + $0x358] sm:$0xff]
    %v538 = vld [vmem:[#allocation2 + $0x360] sm:$0xff]
    %v539 = vld [vmem:[#allocation2 + $0x368] sm:$0xff]
    %v540 = vld [vmem:[#allocation2 + $0x370] sm:$0xff]
    %v541 = vld [vmem:[#allocation2 + $0x378] sm:$0xff]
    %v542 = vld [vmem:[#allocation2 + $0x380] sm:$0xff]
    %v543 = vld [vmem:[#allocation2 + $0x388] sm:$0xff]
    %v544 = vld [vmem:[#allocation2 + $0x390] sm:$0xff]
    %v545 = vld [vmem:[#allocation2 + $0x398] sm:$0xff]
    %v546 = vld [vmem:[#allocation2 + $0x3a0] sm:$0xff]
    %v547 = vld [vmem:[#allocation2 + $0x3a8] sm:$0xff]
    %v548 = vld [vmem:[#allocation2 + $0x3b0] sm:$0xff]
    %v549 = vld [vmem:[#allocation2 + $0x3b8] sm:$0xff]
    %v550 = vld [vmem:[#allocation2 + $0x3c0] sm:$0xff]
    %v551 = vld [vmem:[#allocation2 + $0x3c8] sm:$0xff]
    %v552 = vld [vmem:[#allocation2 + $0x3d0] sm:$0xff]
    %v553 = vld [vmem:[#allocation2 + $0x3d8] sm:$0xff]
    %v554 = vld [vmem:[#allocation2 + $0x3e0] sm:$0xff]
    %v555 = vld [vmem:[#allocation2 + $0x3e8] sm:$0xff]
    %v556 = vld [vmem:[#allocation2 + $0x3f0] sm:$0xff]
    %v557 = vld [vmem:[#allocation2 + $0x3f8] sm:$0xff]
    %v558 = vld [vmem:[%s4] sm:$0xf]
    %v560 = vperm.slane %v558, 0
    %v561 = vperm.slane %v558, 1
    %v562 = vperm.slane %v558, 2
    %v563 = vperm.slane %v558, 3
    %v696 = vunpack.c.l.b16 %v430
    %v697 = vunpack.c.h.b16 %v430
    %v698 = vunpack.c.l.b16 %v431
    %v699 = vunpack.c.h.b16 %v431
    %v700 = vunpack.c.l.b16 %v432
    %v701 = vunpack.c.h.b16 %v432
    %v702 = vunpack.c.l.b16 %v433
    %v703 = vunpack.c.h.b16 %v433
    %v704 = vunpack.c.l.b16 %v434
    %v705 = vunpack.c.h.b16 %v434
    %v706 = vunpack.c.l.b16 %v435
    %v707 = vunpack.c.h.b16 %v435
    %v708 = vunpack.c.l.b16 %v436
    %v709 = vunpack.c.h.b16 %v436
    %v710 = vunpack.c.l.b16 %v437
    %v711 = vunpack.c.h.b16 %v437
    %v712 = vunpack.c.l.b16 %v438
    %v713 = vunpack.c.h.b16 %v438
    %v714 = vunpack.c.l.b16 %v439
    %v715 = vunpack.c.h.b16 %v439
    %v716 = vunpack.c.l.b16 %v440
    %v717 = vunpack.c.h.b16 %v440
    %v718 = vunpack.c.l.b16 %v441
    %v719 = vunpack.c.h.b16 %v441
    %v720 = vunpack.c.l.b16 %v442
    %v721 = vunpack.c.h.b16 %v442
    %v722 = vunpack.c.l.b16 %v443
    %v723 = vunpack.c.h.b16 %v443
    %v724 = vunpack.c.l.b16 %v444
    %v725 = vunpack.c.h.b16 %v444
    %v726 = vunpack.c.l.b16 %v445
    %v727 = vunpack.c.h.b16 %v445
    %v728 = vunpack.c.l.b16 %v446
    %v729 = vunpack.c.h.b16 %v446
    %v730 = vunpack.c.l.b16 %v447
    %v731 = vunpack.c.h.b16 %v447
    %v732 = vunpack.c.l.b16 %v448
    %v733 = vunpack.c.h.b16 %v448
    %v734 = vunpack.c.l.b16 %v449
    %v735 = vunpack.c.h.b16 %v449
    %v736 = vunpack.c.l.b16 %v450
    %v737 = vunpack.c.h.b16 %v450
    %v738 = vunpack.c.l.b16 %v451
    %v739 = vunpack.c.h.b16 %v451
    %v740 = vunpack.c.l.b16 %v452
    %v741 = vunpack.c.h.b16 %v452
    %v742 = vunpack.c.l.b16 %v453
    %v743 = vunpack.c.h.b16 %v453
    %v744 = vunpack.c.l.b16 %v454
    %v745 = vunpack.c.h.b16 %v454
    %v746 = vunpack.c.l.b16 %v455
    %v747 = vunpack.c.h.b16 %v455
    %v748 = vunpack.c.l.b16 %v456
    %v749 = vunpack.c.h.b16 %v456
    %v750 = vunpack.c.l.b16 %v457
    %v751 = vunpack.c.h.b16 %v457
    %v752 = vunpack.c.l.b16 %v458
    %v753 = vunpack.c.h.b16 %v458
    %v754 = vunpack.c.l.b16 %v459
    %v755 = vunpack.c.h.b16 %v459
    %v756 = vunpack.c.l.b16 %v460
    %v757 = vunpack.c.h.b16 %v460
    %v758 = vunpack.c.l.b16 %v461
    %v759 = vunpack.c.h.b16 %v461
    %v760 = vunpack.c.l.b16 %v462
    %v761 = vunpack.c.h.b16 %v462
    %v762 = vunpack.c.l.b16 %v463
    %v763 = vunpack.c.h.b16 %v463
    %v764 = vunpack.c.l.b16 %v464
    %v765 = vunpack.c.h.b16 %v464
    %v766 = vunpack.c.l.b16 %v465
    %v767 = vunpack.c.h.b16 %v465
    %v768 = vunpack.c.l.b16 %v466
    %v769 = vunpack.c.h.b16 %v466
    %v770 = vunpack.c.l.b16 %v467
    %v771 = vunpack.c.h.b16 %v467
    %v772 = vunpack.c.l.b16 %v468
    %v773 = vunpack.c.h.b16 %v468
    %v774 = vunpack.c.l.b16 %v469
    %v775 = vunpack.c.h.b16 %v469
    %v776 = vunpack.c.l.b16 %v470
    %v777 = vunpack.c.h.b16 %v470
    %v778 = vunpack.c.l.b16 %v471
    %v779 = vunpack.c.h.b16 %v471
    %v780 = vunpack.c.l.b16 %v472
    %v781 = vunpack.c.h.b16 %v472
    %v782 = vunpack.c.l.b16 %v473
    %v783 = vunpack.c.h.b16 %v473
    %v784 = vunpack.c.l.b16 %v474
    %v785 = vunpack.c.h.b16 %v474
    %v786 = vunpack.c.l.b16 %v475
    %v787 = vunpack.c.h.b16 %v475
    %v788 = vunpack.c.l.b16 %v476
    %v789 = vunpack.c.h.b16 %v476
    %v790 = vunpack.c.l.b16 %v477
    %v791 = vunpack.c.h.b16 %v477
    %v792 = vunpack.c.l.b16 %v478
    %v793 = vunpack.c.h.b16 %v478
    %v794 = vunpack.c.l.b16 %v479
    %v795 = vunpack.c.h.b16 %v479
    %v796 = vunpack.c.l.b16 %v480
    %v797 = vunpack.c.h.b16 %v480
    %v798 = vunpack.c.l.b16 %v481
    %v799 = vunpack.c.h.b16 %v481
    %v800 = vunpack.c.l.b16 %v482
    %v801 = vunpack.c.h.b16 %v482
    %v802 = vunpack.c.l.b16 %v483
    %v803 = vunpack.c.h.b16 %v483
    %v804 = vunpack.c.l.b16 %v484
    %v805 = vunpack.c.h.b16 %v484
    %v806 = vunpack.c.l.b16 %v485
    %v807 = vunpack.c.h.b16 %v485
    %v808 = vunpack.c.l.b16 %v486
    %v809 = vunpack.c.h.b16 %v486
    %v810 = vunpack.c.l.b16 %v487
    %v811 = vunpack.c.h.b16 %v487
    %v812 = vunpack.c.l.b16 %v488
    %v813 = vunpack.c.h.b16 %v488
    %v814 = vunpack.c.l.b16 %v489
    %v815 = vunpack.c.h.b16 %v489
    %v816 = vunpack.c.l.b16 %v490
    %v817 = vunpack.c.h.b16 %v490
    %v818 = vunpack.c.l.b16 %v491
    %v819 = vunpack.c.h.b16 %v491
    %v820 = vunpack.c.l.b16 %v492
    %v821 = vunpack.c.h.b16 %v492
    %v822 = vunpack.c.l.b16 %v493
    %v823 = vunpack.c.h.b16 %v493
    %v824 = vunpack.c.l.b16 %v494
    %v825 = vunpack.c.h.b16 %v494
    %v826 = vunpack.c.l.b16 %v495
    %v827 = vunpack.c.h.b16 %v495
    %v828 = vunpack.c.l.b16 %v496
    %v829 = vunpack.c.h.b16 %v496
    %v830 = vunpack.c.l.b16 %v497
    %v831 = vunpack.c.h.b16 %v497
    %v832 = vunpack.c.l.b16 %v498
    %v833 = vunpack.c.h.b16 %v498
    %v834 = vunpack.c.l.b16 %v499
    %v835 = vunpack.c.h.b16 %v499
    %v836 = vunpack.c.l.b16 %v500
    %v837 = vunpack.c.h.b16 %v500
    %v838 = vunpack.c.l.b16 %v501
    %v839 = vunpack.c.h.b16 %v501
    %v840 = vunpack.c.l.b16 %v502
    %v841 = vunpack.c.h.b16 %v502
    %v842 = vunpack.c.l.b16 %v503
    %v843 = vunpack.c.h.b16 %v503
    %v844 = vunpack.c.l.b16 %v504
    %v845 = vunpack.c.h.b16 %v504
    %v846 = vunpack.c.l.b16 %v505
    %v847 = vunpack.c.h.b16 %v505
    %v848 = vunpack.c.l.b16 %v506
    %v849 = vunpack.c.h.b16 %v506
    %v850 = vunpack.c.l.b16 %v507
    %v851 = vunpack.c.h.b16 %v507
    %v852 = vunpack.c.l.b16 %v508
    %v853 = vunpack.c.h.b16 %v508
    %v854 = vunpack.c.l.b16 %v509
    %v855 = vunpack.c.h.b16 %v509
    %v856 = vunpack.c.l.b16 %v510
    %v857 = vunpack.c.h.b16 %v510
    %v858 = vunpack.c.l.b16 %v511
    %v859 = vunpack.c.h.b16 %v511
    %v860 = vunpack.c.l.b16 %v512
    %v861 = vunpack.c.h.b16 %v512
    %v862 = vunpack.c.l.b16 %v513
    %v863 = vunpack.c.h.b16 %v513
    %v864 = vunpack.c.l.b16 %v514
    %v865 = vunpack.c.h.b16 %v514
    %v866 = vunpack.c.l.b16 %v515
    %v867 = vunpack.c.h.b16 %v515
    %v868 = vunpack.c.l.b16 %v516
    %v869 = vunpack.c.h.b16 %v516
    %v870 = vunpack.c.l.b16 %v517
    %v871 = vunpack.c.h.b16 %v517
    %v872 = vunpack.c.l.b16 %v518
    %v873 = vunpack.c.h.b16 %v518
    %v874 = vunpack.c.l.b16 %v519
    %v875 = vunpack.c.h.b16 %v519
    %v876 = vunpack.c.l.b16 %v520
    %v877 = vunpack.c.h.b16 %v520
    %v878 = vunpack.c.l.b16 %v521
    %v879 = vunpack.c.h.b16 %v521
    %v880 = vunpack.c.l.b16 %v522
    %v881 = vunpack.c.h.b16 %v522
    %v882 = vunpack.c.l.b16 %v523
    %v883 = vunpack.c.h.b16 %v523
    %v884 = vunpack.c.l.b16 %v524
    %v885 = vunpack.c.h.b16 %v524
    %v886 = vunpack.c.l.b16 %v525
    %v887 = vunpack.c.h.b16 %v525
    %v888 = vunpack.c.l.b16 %v526
    %v889 = vunpack.c.h.b16 %v526
    %v890 = vunpack.c.l.b16 %v527
    %v891 = vunpack.c.h.b16 %v527
    %v892 = vunpack.c.l.b16 %v528
    %v893 = vunpack.c.h.b16 %v528
    %v894 = vunpack.c.l.b16 %v529
    %v895 = vunpack.c.h.b16 %v529
    %v896 = vunpack.c.l.b16 %v530
    %v897 = vunpack.c.h.b16 %v530
    %v898 = vunpack.c.l.b16 %v531
    %v899 = vunpack.c.h.b16 %v531
    %v900 = vunpack.c.l.b16 %v532
    %v901 = vunpack.c.h.b16 %v532
    %v902 = vunpack.c.l.b16 %v533
    %v903 = vunpack.c.h.b16 %v533
    %v904 = vunpack.c.l.b16 %v534
    %v905 = vunpack.c.h.b16 %v534
    %v906 = vunpack.c.l.b16 %v535
    %v907 = vunpack.c.h.b16 %v535
    %v908 = vunpack.c.l.b16 %v536
    %v909 = vunpack.c.h.b16 %v536
    %v910 = vunpack.c.l.b16 %v537
    %v911 = vunpack.c.h.b16 %v537
    %v912 = vunpack.c.l.b16 %v538
    %v913 = vunpack.c.h.b16 %v538
    %v914 = vunpack.c.l.b16 %v539
    %v915 = vunpack.c.h.b16 %v539
    %v916 = vunpack.c.l.b16 %v540
    %v917 = vunpack.c.h.b16 %v540
    %v918 = vunpack.c.l.b16 %v541
    %v919 = vunpack.c.h.b16 %v541
    %v920 = vunpack.c.l.b16 %v542
    %v921 = vunpack.c.h.b16 %v542
    %v922 = vunpack.c.l.b16 %v543
    %v923 = vunpack.c.h.b16 %v543
    %v924 = vunpack.c.l.b16 %v544
    %v925 = vunpack.c.h.b16 %v544
    %v926 = vunpack.c.l.b16 %v545
    %v927 = vunpack.c.h.b16 %v545
    %v928 = vunpack.c.l.b16 %v546
    %v929 = vunpack.c.h.b16 %v546
    %v930 = vunpack.c.l.b16 %v547
    %v931 = vunpack.c.h.b16 %v547
    %v932 = vunpack.c.l.b16 %v548
    %v933 = vunpack.c.h.b16 %v548
    %v934 = vunpack.c.l.b16 %v549
    %v935 = vunpack.c.h.b16 %v549
    %v936 = vunpack.c.l.b16 %v550
    %v937 = vunpack.c.h.b16 %v550
    %v938 = vunpack.c.l.b16 %v551
    %v939 = vunpack.c.h.b16 %v551
    %v940 = vunpack.c.l.b16 %v552
    %v941 = vunpack.c.h.b16 %v552
    %v942 = vunpack.c.l.b16 %v553
    %v943 = vunpack.c.h.b16 %v553
    %v944 = vunpack.c.l.b16 %v554
    %v945 = vunpack.c.h.b16 %v554
    %v946 = vunpack.c.l.b16 %v555
    %v947 = vunpack.c.h.b16 %v555
    %v948 = vunpack.c.l.b16 %v556
    %v949 = vunpack.c.h.b16 %v556
    %v950 = vunpack.c.l.b16 %v557
    %v951 = vunpack.c.h.b16 %v557
    %v952 = vpack.c.b16 %v700, %v696
    %v953 = vpack.c.b16 %v701, %v697
    %v954 = vpack.c.b16 %v702, %v698
    %v955 = vpack.c.b16 %v703, %v699
    %v956 = vpack.c.b16 %v708, %v704
    %v957 = vpack.c.b16 %v709, %v705
    %v958 = vpack.c.b16 %v710, %v706
    %v959 = vpack.c.b16 %v711, %v707
    %v960 = vpack.c.b16 %v716, %v712
    %v961 = vpack.c.b16 %v717, %v713
    %v962 = vpack.c.b16 %v718, %v714
    %v963 = vpack.c.b16 %v719, %v715
    %v964 = vpack.c.b16 %v724, %v720
    %v965 = vpack.c.b16 %v725, %v721
    %v966 = vpack.c.b16 %v726, %v722
    %v967 = vpack.c.b16 %v727, %v723
    %v968 = vpack.c.b16 %v732, %v728
    %v969 = vpack.c.b16 %v733, %v729
    %v970 = vpack.c.b16 %v734, %v730
    %v971 = vpack.c.b16 %v735, %v731
    %v972 = vpack.c.b16 %v740, %v736
    %v973 = vpack.c.b16 %v741, %v737
    %v974 = vpack.c.b16 %v742, %v738
    %v975 = vpack.c.b16 %v743, %v739
    %v976 = vpack.c.b16 %v748, %v744
    %v977 = vpack.c.b16 %v749, %v745
    %v978 = vpack.c.b16 %v750, %v746
    %v979 = vpack.c.b16 %v751, %v747
    %v980 = vpack.c.b16 %v756, %v752
    %v981 = vpack.c.b16 %v757, %v753
    %v982 = vpack.c.b16 %v758, %v754
    %v983 = vpack.c.b16 %v759, %v755
    %v984 = vpack.c.b16 %v764, %v760
    %v985 = vpack.c.b16 %v765, %v761
    %v986 = vpack.c.b16 %v766, %v762
    %v987 = vpack.c.b16 %v767, %v763
    %v988 = vpack.c.b16 %v772, %v768
    %v989 = vpack.c.b16 %v773, %v769
    %v990 = vpack.c.b16 %v774, %v770
    %v991 = vpack.c.b16 %v775, %v771
    %v992 = vpack.c.b16 %v780, %v776
    %v993 = vpack.c.b16 %v781, %v777
    %v994 = vpack.c.b16 %v782, %v778
    %v995 = vpack.c.b16 %v783, %v779
    %v996 = vpack.c.b16 %v788, %v784
    %v997 = vpack.c.b16 %v789, %v785
    %v998 = vpack.c.b16 %v790, %v786
    %v999 = vpack.c.b16 %v791, %v787
    %v1000 = vpack.c.b16 %v796, %v792
    %v1001 = vpack.c.b16 %v797, %v793
    %v1002 = vpack.c.b16 %v798, %v794
    %v1003 = vpack.c.b16 %v799, %v795
    %v1004 = vpack.c.b16 %v804, %v800
    %v1005 = vpack.c.b16 %v805, %v801
    %v1006 = vpack.c.b16 %v806, %v802
    %v1007 = vpack.c.b16 %v807, %v803
    %v1008 = vpack.c.b16 %v812, %v808
    %v1009 = vpack.c.b16 %v813, %v809
    %v1010 = vpack.c.b16 %v814, %v810
    %v1011 = vpack.c.b16 %v815, %v811
    %v1012 = vpack.c.b16 %v820, %v816
    %v1013 = vpack.c.b16 %v821, %v817
    %v1014 = vpack.c.b16 %v822, %v818
    %v1015 = vpack.c.b16 %v823, %v819
    %v1016 = vpack.c.b16 %v828, %v824
    %v1017 = vpack.c.b16 %v829, %v825
    %v1018 = vpack.c.b16 %v830, %v826
    %v1019 = vpack.c.b16 %v831, %v827
    %v1020 = vpack.c.b16 %v836, %v832
    %v1021 = vpack.c.b16 %v837, %v833
    %v1022 = vpack.c.b16 %v838, %v834
    %v1023 = vpack.c.b16 %v839, %v835
    %v1024 = vpack.c.b16 %v844, %v840
    %v1025 = vpack.c.b16 %v845, %v841
    %v1026 = vpack.c.b16 %v846, %v842
    %v1027 = vpack.c.b16 %v847, %v843
    %v1028 = vpack.c.b16 %v852, %v848
    %v1029 = vpack.c.b16 %v853, %v849
    %v1030 = vpack.c.b16 %v854, %v850
    %v1031 = vpack.c.b16 %v855, %v851
    %v1032 = vpack.c.b16 %v860, %v856
    %v1033 = vpack.c.b16 %v861, %v857
    %v1034 = vpack.c.b16 %v862, %v858
    %v1035 = vpack.c.b16 %v863, %v859
    %v1036 = vpack.c.b16 %v868, %v864
    %v1037 = vpack.c.b16 %v869, %v865
    %v1038 = vpack.c.b16 %v870, %v866
    %v1039 = vpack.c.b16 %v871, %v867
    %v1040 = vpack.c.b16 %v876, %v872
    %v1041 = vpack.c.b16 %v877, %v873
    %v1042 = vpack.c.b16 %v878, %v874
    %v1043 = vpack.c.b16 %v879, %v875
    %v1044 = vpack.c.b16 %v884, %v880
    %v1045 = vpack.c.b16 %v885, %v881
    %v1046 = vpack.c.b16 %v886, %v882
    %v1047 = vpack.c.b16 %v887, %v883
    %v1048 = vpack.c.b16 %v892, %v888
    %v1049 = vpack.c.b16 %v893, %v889
    %v1050 = vpack.c.b16 %v894, %v890
    %v1051 = vpack.c.b16 %v895, %v891
    %v1052 = vpack.c.b16 %v900, %v896
    %v1053 = vpack.c.b16 %v901, %v897
    %v1054 = vpack.c.b16 %v902, %v898
    %v1055 = vpack.c.b16 %v903, %v899
    %v1056 = vpack.c.b16 %v908, %v904
    %v1057 = vpack.c.b16 %v909, %v905
    %v1058 = vpack.c.b16 %v910, %v906
    %v1059 = vpack.c.b16 %v911, %v907
    %v1060 = vpack.c.b16 %v916, %v912
    %v1061 = vpack.c.b16 %v917, %v913
    %v1062 = vpack.c.b16 %v918, %v914
    %v1063 = vpack.c.b16 %v919, %v915
    %v1064 = vpack.c.b16 %v924, %v920
    %v1065 = vpack.c.b16 %v925, %v921
    %v1066 = vpack.c.b16 %v926, %v922
    %v1067 = vpack.c.b16 %v927, %v923
    %v1068 = vpack.c.b16 %v932, %v928
    %v1069 = vpack.c.b16 %v933, %v929
    %v1070 = vpack.c.b16 %v934, %v930
    %v1071 = vpack.c.b16 %v935, %v931
    %v1072 = vpack.c.b16 %v940, %v936
    %v1073 = vpack.c.b16 %v941, %v937
    %v1074 = vpack.c.b16 %v942, %v938
    %v1075 = vpack.c.b16 %v943, %v939
    %v1076 = vpack.c.b16 %v948, %v944
    %v1077 = vpack.c.b16 %v949, %v945
    %v1078 = vpack.c.b16 %v950, %v946
    %v1079 = vpack.c.b16 %v951, %v947
    %1208 = vmatpush.bf16.msra.mxu0 %v980
    %1209 = vmatpush.bf16.msra.mxu0 %v976
    %1210 = vmatpush.bf16.msra.mxu0 %v972
    %1211 = vmatpush.bf16.msra.mxu0 %v968
    %1212 = vmatpush.bf16.msra.mxu0 %v964
    %1213 = vmatpush.bf16.msra.mxu0 %v960
    %1214 = vmatpush.bf16.msra.mxu0 %v956
    %1215 = vmatpush.bf16.msra.mxu0 %v952
    %1216 = vmatmul.bf16.gmra.mxu0 %v414
    %v1217 = vpop.f32.mrf.mxu0
    %v1218 = vadd.f32 %v560, %v1217
    %v1219 = vpop.f32.mrf.mxu0
    %v1220 = vadd.f32 %v560, %v1219
    %1221 = vmatmul.bf16.gmra.mxu0 %v418
    %v1222 = vpop.f32.mrf.mxu0
    %v1223 = vadd.f32 %v560, %v1222
    %v1224 = vpop.f32.mrf.mxu0
    %v1225 = vadd.f32 %v560, %v1224
    %1226 = vmatmul.bf16.gmra.mxu0 %v422
    %v1227 = vpop.f32.mrf.mxu0
    %v1228 = vadd.f32 %v560, %v1227
    %v1229 = vpop.f32.mrf.mxu0
    %v1230 = vadd.f32 %v560, %v1229
    %1231 = vmatmul.bf16.gmra.mxu0 %v426
    %v1232 = vpop.f32.mrf.mxu0
    %v1233 = vadd.f32 %v560, %v1232
    %v1234 = vpop.f32.mrf.mxu0
    %v1235 = vadd.f32 %v560, %v1234
    %1236 = vdwg.mxu0
    %1237 = vmatpush.bf16.msra.mxu0 %v1012
    %1238 = vmatpush.bf16.msra.mxu0 %v1008
    %1239 = vmatpush.bf16.msra.mxu0 %v1004
    %1240 = vmatpush.bf16.msra.mxu0 %v1000
    %1241 = vmatpush.bf16.msra.mxu0 %v996
    %1242 = vmatpush.bf16.msra.mxu0 %v992
    %1243 = vmatpush.bf16.msra.mxu0 %v988
    %1244 = vmatpush.bf16.msra.mxu0 %v984
    %1245 = vmatmul.bf16.gmra.mxu0 %v415
    %v1246 = vpop.f32.mrf.mxu0
    %v1247 = vadd.f32 %v1218, %v1246
    %v1248 = vpop.f32.mrf.mxu0
    %v1249 = vadd.f32 %v1220, %v1248
    %1250 = vmatmul.bf16.gmra.mxu0 %v419
    %v1251 = vpop.f32.mrf.mxu0
    %v1252 = vadd.f32 %v1223, %v1251
    %v1253 = vpop.f32.mrf.mxu0
    %v1254 = vadd.f32 %v1225, %v1253
    %1255 = vmatmul.bf16.gmra.mxu0 %v423
    %v1256 = vpop.f32.mrf.mxu0
    %v1257 = vadd.f32 %v1228, %v1256
    %v1258 = vpop.f32.mrf.mxu0
    %v1259 = vadd.f32 %v1230, %v1258
    %1260 = vmatmul.bf16.gmra.mxu0 %v427
    %v1261 = vpop.f32.mrf.mxu0
    %v1262 = vadd.f32 %v1233, %v1261
    %v1263 = vpop.f32.mrf.mxu0
    %v1264 = vadd.f32 %v1235, %v1263
    %1265 = vdwg.mxu0
    %1266 = vmatpush.bf16.msra.mxu0 %v1044
    %1267 = vmatpush.bf16.msra.mxu0 %v1040
    %1268 = vmatpush.bf16.msra.mxu0 %v1036
    %1269 = vmatpush.bf16.msra.mxu0 %v1032
    %1270 = vmatpush.bf16.msra.mxu0 %v1028
    %1271 = vmatpush.bf16.msra.mxu0 %v1024
    %1272 = vmatpush.bf16.msra.mxu0 %v1020
    %1273 = vmatpush.bf16.msra.mxu0 %v1016
    %1274 = vmatmul.bf16.gmra.mxu0 %v416
    %v1275 = vpop.f32.mrf.mxu0
    %v1276 = vadd.f32 %v1247, %v1275
    %v1277 = vpop.f32.mrf.mxu0
    %v1278 = vadd.f32 %v1249, %v1277
    %1279 = vmatmul.bf16.gmra.mxu0 %v420
    %v1280 = vpop.f32.mrf.mxu0
    %v1281 = vadd.f32 %v1252, %v1280
    %v1282 = vpop.f32.mrf.mxu0
    %v1283 = vadd.f32 %v1254, %v1282
    %1284 = vmatmul.bf16.gmra.mxu0 %v424
    %v1285 = vpop.f32.mrf.mxu0
    %v1286 = vadd.f32 %v1257, %v1285
    %v1287 = vpop.f32.mrf.mxu0
    %v1288 = vadd.f32 %v1259, %v1287
    %1289 = vmatmul.bf16.gmra.mxu0 %v428
    %v1290 = vpop.f32.mrf.mxu0
    %v1291 = vadd.f32 %v1262, %v1290
    %v1292 = vpop.f32.mrf.mxu0
    %v1293 = vadd.f32 %v1264, %v1292
    %1294 = vdwg.mxu0
    %1295 = vmatpush.bf16.msra.mxu0 %v1076
    %1296 = vmatpush.bf16.msra.mxu0 %v1072
    %1297 = vmatpush.bf16.msra.mxu0 %v1068
    %1298 = vmatpush.bf16.msra.mxu0 %v1064
    %1299 = vmatpush.bf16.msra.mxu0 %v1060
    %1300 = vmatpush.bf16.msra.mxu0 %v1056
    %1301 = vmatpush.bf16.msra.mxu0 %v1052
    %1302 = vmatpush.bf16.msra.mxu0 %v1048
    %1303 = vmatmul.bf16.gmra.mxu0 %v417
    %v1304 = vpop.f32.mrf.mxu0
    %v1305 = vadd.f32 %v1276, %v1304
    %v1306 = vpop.f32.mrf.mxu0
    %v1307 = vadd.f32 %v1278, %v1306
    %1308 = vmatmul.bf16.gmra.mxu0 %v421
    %v1309 = vpop.f32.mrf.mxu0
    %v1310 = vadd.f32 %v1281, %v1309
    %v1311 = vpop.f32.mrf.mxu0
    %v1312 = vadd.f32 %v1283, %v1311
    %1313 = vmatmul.bf16.gmra.mxu0 %v425
    %v1314 = vpop.f32.mrf.mxu0
    %v1315 = vadd.f32 %v1286, %v1314
    %v1316 = vpop.f32.mrf.mxu0
    %v1317 = vadd.f32 %v1288, %v1316
    %1318 = vmatmul.bf16.gmra.mxu0 %v429
    %v1319 = vpop.f32.mrf.mxu0
    %v1320 = vadd.f32 %v1291, %v1319
    %v1321 = vpop.f32.mrf.mxu0
    %v1322 = vadd.f32 %v1293, %v1321
    %1323 = vdwg.mxu0
    %1324 = vmatpush.bf16.msra.mxu0 %v981
    %1325 = vmatpush.bf16.msra.mxu0 %v977
    %1326 = vmatpush.bf16.msra.mxu0 %v973
    %1327 = vmatpush.bf16.msra.mxu0 %v969
    %1328 = vmatpush.bf16.msra.mxu0 %v965
    %1329 = vmatpush.bf16.msra.mxu0 %v961
    %1330 = vmatpush.bf16.msra.mxu0 %v957
    %1331 = vmatpush.bf16.msra.mxu0 %v953
    %1332 = vmatmul.bf16.gmra.mxu0 %v414
    %v1333 = vpop.f32.mrf.mxu0
    %v1334 = vadd.f32 %v561, %v1333
    %v1335 = vpop.f32.mrf.mxu0
    %v1336 = vadd.f32 %v561, %v1335
    %1337 = vmatmul.bf16.gmra.mxu0 %v418
    %v1338 = vpop.f32.mrf.mxu0
    %v1339 = vadd.f32 %v561, %v1338
    %v1340 = vpop.f32.mrf.mxu0
    %v1341 = vadd.f32 %v561, %v1340
    %1342 = vmatmul.bf16.gmra.mxu0 %v422
    %v1343 = vpop.f32.mrf.mxu0
    %v1344 = vadd.f32 %v561, %v1343
    %v1345 = vpop.f32.mrf.mxu0
    %v1346 = vadd.f32 %v561, %v1345
    %1347 = vmatmul.bf16.gmra.mxu0 %v426
    %v1348 = vpop.f32.mrf.mxu0
    %v1349 = vadd.f32 %v561, %v1348
    %v1350 = vpop.f32.mrf.mxu0
    %v1351 = vadd.f32 %v561, %v1350
    %1352 = vdwg.mxu0
    %1353 = vmatpush.bf16.msra.mxu0 %v1013
    %1354 = vmatpush.bf16.msra.mxu0 %v1009
    %1355 = vmatpush.bf16.msra.mxu0 %v1005
    %1356 = vmatpush.bf16.msra.mxu0 %v1001
    %1357 = vmatpush.bf16.msra.mxu0 %v997
    %1358 = vmatpush.bf16.msra.mxu0 %v993
    %1359 = vmatpush.bf16.msra.mxu0 %v989
    %1360 = vmatpush.bf16.msra.mxu0 %v985
    %1361 = vmatmul.bf16.gmra.mxu0 %v415
    %v1362 = vpop.f32.mrf.mxu0
    %v1363 = vadd.f32 %v1334, %v1362
    %v1364 = vpop.f32.mrf.mxu0
    %v1365 = vadd.f32 %v1336, %v1364
    %1366 = vmatmul.bf16.gmra.mxu0 %v419
    %v1367 = vpop.f32.mrf.mxu0
    %v1368 = vadd.f32 %v1339, %v1367
    %v1369 = vpop.f32.mrf.mxu0
    %v1370 = vadd.f32 %v1341, %v1369
    %1371 = vmatmul.bf16.gmra.mxu0 %v423
    %v1372 = vpop.f32.mrf.mxu0
    %v1373 = vadd.f32 %v1344, %v1372
    %v1374 = vpop.f32.mrf.mxu0
    %v1375 = vadd.f32 %v1346, %v1374
    %1376 = vmatmul.bf16.gmra.mxu0 %v427
    %v1377 = vpop.f32.mrf.mxu0
    %v1378 = vadd.f32 %v1349, %v1377
    %v1379 = vpop.f32.mrf.mxu0
    %v1380 = vadd.f32 %v1351, %v1379
    %1381 = vdwg.mxu0
    %1382 = vmatpush.bf16.msra.mxu0 %v1045
    %1383 = vmatpush.bf16.msra.mxu0 %v1041
    %1384 = vmatpush.bf16.msra.mxu0 %v1037
    %1385 = vmatpush.bf16.msra.mxu0 %v1033
    %1386 = vmatpush.bf16.msra.mxu0 %v1029
    %1387 = vmatpush.bf16.msra.mxu0 %v1025
    %1388 = vmatpush.bf16.msra.mxu0 %v1021
    %1389 = vmatpush.bf16.msra.mxu0 %v1017
    %1390 = vmatmul.bf16.gmra.mxu0 %v416
    %v1391 = vpop.f32.mrf.mxu0
    %v1392 = vadd.f32 %v1363, %v1391
    %v1393 = vpop.f32.mrf.mxu0
    %v1394 = vadd.f32 %v1365, %v1393
    %1395 = vmatmul.bf16.gmra.mxu0 %v420
    %v1396 = vpop.f32.mrf.mxu0
    %v1397 = vadd.f32 %v1368, %v1396
    %v1398 = vpop.f32.mrf.mxu0
    %v1399 = vadd.f32 %v1370, %v1398
    %1400 = vmatmul.bf16.gmra.mxu0 %v424
    %v1401 = vpop.f32.mrf.mxu0
    %v1402 = vadd.f32 %v1373, %v1401
    %v1403 = vpop.f32.mrf.mxu0
    %v1404 = vadd.f32 %v1375, %v1403
    %1405 = vmatmul.bf16.gmra.mxu0 %v428
    %v1406 = vpop.f32.mrf.mxu0
    %v1407 = vadd.f32 %v1378, %v1406
    %v1408 = vpop.f32.mrf.mxu0
    %v1409 = vadd.f32 %v1380, %v1408
    %1410 = vdwg.mxu0
    %1411 = vmatpush.bf16.msra.mxu0 %v1077
    %1412 = vmatpush.bf16.msra.mxu0 %v1073
    %1413 = vmatpush.bf16.msra.mxu0 %v1069
    %1414 = vmatpush.bf16.msra.mxu0 %v1065
    %1415 = vmatpush.bf16.msra.mxu0 %v1061
    %1416 = vmatpush.bf16.msra.mxu0 %v1057
    %1417 = vmatpush.bf16.msra.mxu0 %v1053
    %1418 = vmatpush.bf16.msra.mxu0 %v1049
    %1419 = vmatmul.bf16.gmra.mxu0 %v417
    %v1420 = vpop.f32.mrf.mxu0
    %v1421 = vadd.f32 %v1392, %v1420
    %v1422 = vpop.f32.mrf.mxu0
    %v1423 = vadd.f32 %v1394, %v1422
    %1424 = vmatmul.bf16.gmra.mxu0 %v421
    %v1425 = vpop.f32.mrf.mxu0
    %v1426 = vadd.f32 %v1397, %v1425
    %v1427 = vpop.f32.mrf.mxu0
    %v1428 = vadd.f32 %v1399, %v1427
    %1429 = vmatmul.bf16.gmra.mxu0 %v425
    %v1430 = vpop.f32.mrf.mxu0
    %v1431 = vadd.f32 %v1402, %v1430
    %v1432 = vpop.f32.mrf.mxu0
    %v1433 = vadd.f32 %v1404, %v1432
    %1434 = vmatmul.bf16.gmra.mxu0 %v429
    %v1435 = vpop.f32.mrf.mxu0
    %v1436 = vadd.f32 %v1407, %v1435
    %v1437 = vpop.f32.mrf.mxu0
    %v1438 = vadd.f32 %v1409, %v1437
    %1439 = vdwg.mxu0
    %1440 = vmatpush.bf16.msra.mxu0 %v982
    %1441 = vmatpush.bf16.msra.mxu0 %v978
    %1442 = vmatpush.bf16.msra.mxu0 %v974
    %1443 = vmatpush.bf16.msra.mxu0 %v970
    %1444 = vmatpush.bf16.msra.mxu0 %v966
    %1445 = vmatpush.bf16.msra.mxu0 %v962
    %1446 = vmatpush.bf16.msra.mxu0 %v958
    %1447 = vmatpush.bf16.msra.mxu0 %v954
    %1448 = vmatmul.bf16.gmra.mxu0 %v414
    %v1449 = vpop.f32.mrf.mxu0
    %v1450 = vadd.f32 %v562, %v1449
    %v1451 = vpop.f32.mrf.mxu0
    %v1452 = vadd.f32 %v562, %v1451
    %1453 = vmatmul.bf16.gmra.mxu0 %v418
    %v1454 = vpop.f32.mrf.mxu0
    %v1455 = vadd.f32 %v562, %v1454
    %v1456 = vpop.f32.mrf.mxu0
    %v1457 = vadd.f32 %v562, %v1456
    %1458 = vmatmul.bf16.gmra.mxu0 %v422
    %v1459 = vpop.f32.mrf.mxu0
    %v1460 = vadd.f32 %v562, %v1459
    %v1461 = vpop.f32.mrf.mxu0
    %v1462 = vadd.f32 %v562, %v1461
    %1463 = vmatmul.bf16.gmra.mxu0 %v426
    %v1464 = vpop.f32.mrf.mxu0
    %v1465 = vadd.f32 %v562, %v1464
    %v1466 = vpop.f32.mrf.mxu0
    %v1467 = vadd.f32 %v562, %v1466
    %1468 = vdwg.mxu0
    %1469 = vmatpush.bf16.msra.mxu0 %v1014
    %1470 = vmatpush.bf16.msra.mxu0 %v1010
    %1471 = vmatpush.bf16.msra.mxu0 %v1006
    %1472 = vmatpush.bf16.msra.mxu0 %v1002
    %1473 = vmatpush.bf16.msra.mxu0 %v998
    %1474 = vmatpush.bf16.msra.mxu0 %v994
    %1475 = vmatpush.bf16.msra.mxu0 %v990
    %1476 = vmatpush.bf16.msra.mxu0 %v986
    %1477 = vmatmul.bf16.gmra.mxu0 %v415
    %v1478 = vpop.f32.mrf.mxu0
    %v1479 = vadd.f32 %v1450, %v1478
    %v1480 = vpop.f32.mrf.mxu0
    %v1481 = vadd.f32 %v1452, %v1480
    %1482 = vmatmul.bf16.gmra.mxu0 %v419
    %v1483 = vpop.f32.mrf.mxu0
    %v1484 = vadd.f32 %v1455, %v1483
    %v1485 = vpop.f32.mrf.mxu0
    %v1486 = vadd.f32 %v1457, %v1485
    %1487 = vmatmul.bf16.gmra.mxu0 %v423
    %v1488 = vpop.f32.mrf.mxu0
    %v1489 = vadd.f32 %v1460, %v1488
    %v1490 = vpop.f32.mrf.mxu0
    %v1491 = vadd.f32 %v1462, %v1490
    %1492 = vmatmul.bf16.gmra.mxu0 %v427
    %v1493 = vpop.f32.mrf.mxu0
    %v1494 = vadd.f32 %v1465, %v1493
    %v1495 = vpop.f32.mrf.mxu0
    %v1496 = vadd.f32 %v1467, %v1495
    %1497 = vdwg.mxu0
    %1498 = vmatpush.bf16.msra.mxu0 %v1046
    %1499 = vmatpush.bf16.msra.mxu0 %v1042
    %1500 = vmatpush.bf16.msra.mxu0 %v1038
    %1501 = vmatpush.bf16.msra.mxu0 %v1034
    %1502 = vmatpush.bf16.msra.mxu0 %v1030
    %1503 = vmatpush.bf16.msra.mxu0 %v1026
    %1504 = vmatpush.bf16.msra.mxu0 %v1022
    %1505 = vmatpush.bf16.msra.mxu0 %v1018
    %1506 = vmatmul.bf16.gmra.mxu0 %v416
    %v1507 = vpop.f32.mrf.mxu0
    %v1508 = vadd.f32 %v1479, %v1507
    %v1509 = vpop.f32.mrf.mxu0
    %v1510 = vadd.f32 %v1481, %v1509
    %1511 = vmatmul.bf16.gmra.mxu0 %v420
    %v1512 = vpop.f32.mrf.mxu0
    %v1513 = vadd.f32 %v1484, %v1512
    %v1514 = vpop.f32.mrf.mxu0
    %v1515 = vadd.f32 %v1486, %v1514
    %1516 = vmatmul.bf16.gmra.mxu0 %v424
    %v1517 = vpop.f32.mrf.mxu0
    %v1518 = vadd.f32 %v1489, %v1517
    %v1519 = vpop.f32.mrf.mxu0
    %v1520 = vadd.f32 %v1491, %v1519
    %1521 = vmatmul.bf16.gmra.mxu0 %v428
    %v1522 = vpop.f32.mrf.mxu0
    %v1523 = vadd.f32 %v1494, %v1522
    %v1524 = vpop.f32.mrf.mxu0
    %v1525 = vadd.f32 %v1496, %v1524
    %1526 = vdwg.mxu0
    %1527 = vmatpush.bf16.msra.mxu0 %v1078
    %1528 = vmatpush.bf16.msra.mxu0 %v1074
    %1529 = vmatpush.bf16.msra.mxu0 %v1070
    %1530 = vmatpush.bf16.msra.mxu0 %v1066
    %1531 = vmatpush.bf16.msra.mxu0 %v1062
    %1532 = vmatpush.bf16.msra.mxu0 %v1058
    %1533 = vmatpush.bf16.msra.mxu0 %v1054
    %1534 = vmatpush.bf16.msra.mxu0 %v1050
    %1535 = vmatmul.bf16.gmra.mxu0 %v417
    %v1536 = vpop.f32.mrf.mxu0
    %v1537 = vadd.f32 %v1508, %v1536
    %v1538 = vpop.f32.mrf.mxu0
    %v1539 = vadd.f32 %v1510, %v1538
    %1540 = vmatmul.bf16.gmra.mxu0 %v421
    %v1541 = vpop.f32.mrf.mxu0
    %v1542 = vadd.f32 %v1513, %v1541
    %v1543 = vpop.f32.mrf.mxu0
    %v1544 = vadd.f32 %v1515, %v1543
    %1545 = vmatmul.bf16.gmra.mxu0 %v425
    %v1546 = vpop.f32.mrf.mxu0
    %v1547 = vadd.f32 %v1518, %v1546
    %v1548 = vpop.f32.mrf.mxu0
    %v1549 = vadd.f32 %v1520, %v1548
    %1550 = vmatmul.bf16.gmra.mxu0 %v429
    %v1551 = vpop.f32.mrf.mxu0
    %v1552 = vadd.f32 %v1523, %v1551
    %v1553 = vpop.f32.mrf.mxu0
    %v1554 = vadd.f32 %v1525, %v1553
    %1555 = vdwg.mxu0
    %1556 = vmatpush.bf16.msra.mxu0 %v983
    %1557 = vmatpush.bf16.msra.mxu0 %v979
    %1558 = vmatpush.bf16.msra.mxu0 %v975
    %1559 = vmatpush.bf16.msra.mxu0 %v971
    %1560 = vmatpush.bf16.msra.mxu0 %v967
    %1561 = vmatpush.bf16.msra.mxu0 %v963
    %1562 = vmatpush.bf16.msra.mxu0 %v959
    %1563 = vmatpush.bf16.msra.mxu0 %v955
    %1564 = vmatmul.bf16.gmra.mxu0 %v414
    %v1565 = vpop.f32.mrf.mxu0
    %v1566 = vadd.f32 %v563, %v1565
    %v1567 = vpop.f32.mrf.mxu0
    %v1568 = vadd.f32 %v563, %v1567
    %1569 = vmatmul.bf16.gmra.mxu0 %v418
    %v1570 = vpop.f32.mrf.mxu0
    %v1571 = vadd.f32 %v563, %v1570
    %v1572 = vpop.f32.mrf.mxu0
    %v1573 = vadd.f32 %v563, %v1572
    %1574 = vmatmul.bf16.gmra.mxu0 %v422
    %v1575 = vpop.f32.mrf.mxu0
    %v1576 = vadd.f32 %v563, %v1575
    %v1577 = vpop.f32.mrf.mxu0
    %v1578 = vadd.f32 %v563, %v1577
    %1579 = vmatmul.bf16.gmra.mxu0 %v426
    %v1580 = vpop.f32.mrf.mxu0
    %v1581 = vadd.f32 %v563, %v1580
    %v1582 = vpop.f32.mrf.mxu0
    %v1583 = vadd.f32 %v563, %v1582
    %1584 = vdwg.mxu0
    %1585 = vmatpush.bf16.msra.mxu0 %v1015
    %1586 = vmatpush.bf16.msra.mxu0 %v1011
    %1587 = vmatpush.bf16.msra.mxu0 %v1007
    %1588 = vmatpush.bf16.msra.mxu0 %v1003
    %1589 = vmatpush.bf16.msra.mxu0 %v999
    %1590 = vmatpush.bf16.msra.mxu0 %v995
    %1591 = vmatpush.bf16.msra.mxu0 %v991
    %1592 = vmatpush.bf16.msra.mxu0 %v987
    %1593 = vmatmul.bf16.gmra.mxu0 %v415
    %v1594 = vpop.f32.mrf.mxu0
    %v1595 = vadd.f32 %v1566, %v1594
    %v1596 = vpop.f32.mrf.mxu0
    %v1597 = vadd.f32 %v1568, %v1596
    %1598 = vmatmul.bf16.gmra.mxu0 %v419
    %v1599 = vpop.f32.mrf.mxu0
    %v1600 = vadd.f32 %v1571, %v1599
    %v1601 = vpop.f32.mrf.mxu0
    %v1602 = vadd.f32 %v1573, %v1601
    %1603 = vmatmul.bf16.gmra.mxu0 %v423
    %v1604 = vpop.f32.mrf.mxu0
    %v1605 = vadd.f32 %v1576, %v1604
    %v1606 = vpop.f32.mrf.mxu0
    %v1607 = vadd.f32 %v1578, %v1606
    %1608 = vmatmul.bf16.gmra.mxu0 %v427
    %v1609 = vpop.f32.mrf.mxu0
    %v1610 = vadd.f32 %v1581, %v1609
    %v1611 = vpop.f32.mrf.mxu0
    %v1612 = vadd.f32 %v1583, %v1611
    %1613 = vdwg.mxu0
    %1614 = vmatpush.bf16.msra.mxu0 %v1047
    %1615 = vmatpush.bf16.msra.mxu0 %v1043
    %1616 = vmatpush.bf16.msra.mxu0 %v1039
    %1617 = vmatpush.bf16.msra.mxu0 %v1035
    %1618 = vmatpush.bf16.msra.mxu0 %v1031
    %1619 = vmatpush.bf16.msra.mxu0 %v1027
    %1620 = vmatpush.bf16.msra.mxu0 %v1023
    %1621 = vmatpush.bf16.msra.mxu0 %v1019
    %1622 = vmatmul.bf16.gmra.mxu0 %v416
    %v1623 = vpop.f32.mrf.mxu0
    %v1624 = vadd.f32 %v1595, %v1623
    %v1625 = vpop.f32.mrf.mxu0
    %v1626 = vadd.f32 %v1597, %v1625
    %1627 = vmatmul.bf16.gmra.mxu0 %v420
    %v1628 = vpop.f32.mrf.mxu0
    %v1629 = vadd.f32 %v1600, %v1628
    %v1630 = vpop.f32.mrf.mxu0
    %v1631 = vadd.f32 %v1602, %v1630
    %1632 = vmatmul.bf16.gmra.mxu0 %v424
    %v1633 = vpop.f32.mrf.mxu0
    %v1634 = vadd.f32 %v1605, %v1633
    %v1635 = vpop.f32.mrf.mxu0
    %v1636 = vadd.f32 %v1607, %v1635
    %1637 = vmatmul.bf16.gmra.mxu0 %v428
    %v1638 = vpop.f32.mrf.mxu0
    %v1639 = vadd.f32 %v1610, %v1638
    %v1640 = vpop.f32.mrf.mxu0
    %v1641 = vadd.f32 %v1612, %v1640
    %1642 = vdwg.mxu0
    %1643 = vmatpush.bf16.msra.mxu0 %v1079
    %1644 = vmatpush.bf16.msra.mxu0 %v1075
    %1645 = vmatpush.bf16.msra.mxu0 %v1071
    %1646 = vmatpush.bf16.msra.mxu0 %v1067
    %1647 = vmatpush.bf16.msra.mxu0 %v1063
    %1648 = vmatpush.bf16.msra.mxu0 %v1059
    %1649 = vmatpush.bf16.msra.mxu0 %v1055
    %1650 = vmatpush.bf16.msra.mxu0 %v1051
    %1651 = vmatmul.bf16.gmra.mxu0 %v417
    %v1652 = vpop.f32.mrf.mxu0
    %v1653 = vadd.f32 %v1624, %v1652
    %v1654 = vpop.f32.mrf.mxu0
    %v1655 = vadd.f32 %v1626, %v1654
    %1656 = vmatmul.bf16.gmra.mxu0 %v421
    %v1657 = vpop.f32.mrf.mxu0
    %v1658 = vadd.f32 %v1629, %v1657
    %v1659 = vpop.f32.mrf.mxu0
    %v1660 = vadd.f32 %v1631, %v1659
    %1661 = vmatmul.bf16.gmra.mxu0 %v425
    %v1662 = vpop.f32.mrf.mxu0
    %v1663 = vadd.f32 %v1634, %v1662
    %v1664 = vpop.f32.mrf.mxu0
    %v1665 = vadd.f32 %v1636, %v1664
    %1666 = vmatmul.bf16.gmra.mxu0 %v429
    %v1667 = vpop.f32.mrf.mxu0
    %v1668 = vadd.f32 %v1639, %v1667
    %v1669 = vpop.f32.mrf.mxu0
    %v1670 = vadd.f32 %v1641, %v1669
    %1671 = vdwg.mxu0
    %v1672 = vsub.f32 0.0, %v1305
    %v1673 = vsub.f32 0.0, %v1421
    %v1674 = vsub.f32 0.0, %v1537
    %v1675 = vsub.f32 0.0, %v1653
    %v1676 = vsub.f32 0.0, %v1307
    %v1677 = vsub.f32 0.0, %v1423
    %v1678 = vsub.f32 0.0, %v1539
    %v1679 = vsub.f32 0.0, %v1655
    %v1680 = vsub.f32 0.0, %v1310
    %v1681 = vsub.f32 0.0, %v1426
    %v1682 = vsub.f32 0.0, %v1542
    %v1683 = vsub.f32 0.0, %v1658
    %v1684 = vsub.f32 0.0, %v1312
    %v1685 = vsub.f32 0.0, %v1428
    %v1686 = vsub.f32 0.0, %v1544
    %v1687 = vsub.f32 0.0, %v1660
    %v1688 = vsub.f32 0.0, %v1315
    %v1689 = vsub.f32 0.0, %v1431
    %v1690 = vsub.f32 0.0, %v1547
    %v1691 = vsub.f32 0.0, %v1663
    %v1692 = vsub.f32 0.0, %v1317
    %v1693 = vsub.f32 0.0, %v1433
    %v1694 = vsub.f32 0.0, %v1549
    %v1695 = vsub.f32 0.0, %v1665
    %v1696 = vsub.f32 0.0, %v1320
    %v1697 = vsub.f32 0.0, %v1436
    %v1698 = vsub.f32 0.0, %v1552
    %v1699 = vsub.f32 0.0, %v1668
    %v1700 = vsub.f32 0.0, %v1322
    %v1701 = vsub.f32 0.0, %v1438
    %v1702 = vsub.f32 0.0, %v1554
    %v1703 = vsub.f32 0.0, %v1670
    %v1704 = vmul.f32 %v1672, 1.442695
    %v1705 = vpow.pop %v1704
    %v1706 = vmul.f32 %v1673, 1.442695
    %v1707 = vpow.pop %v1706
    %v1708 = vmul.f32 %v1674, 1.442695
    %v1709 = vpow.pop %v1708
    %v1710 = vmul.f32 %v1675, 1.442695
    %v1711 = vpow.pop %v1710
    %v1712 = vmul.f32 %v1676, 1.442695
    %v1713 = vpow.pop %v1712
    %v1714 = vmul.f32 %v1677, 1.442695
    %v1715 = vpow.pop %v1714
    %v1716 = vmul.f32 %v1678, 1.442695
    %v1717 = vpow.pop %v1716
    %v1718 = vmul.f32 %v1679, 1.442695
    %v1719 = vpow.pop %v1718
    %v1720 = vmul.f32 %v1680, 1.442695
    %v1721 = vpow.pop %v1720
    %v1722 = vmul.f32 %v1681, 1.442695
    %v1723 = vpow.pop %v1722
    %v1724 = vmul.f32 %v1682, 1.442695
    %v1725 = vpow.pop %v1724
    %v1726 = vmul.f32 %v1683, 1.442695
    %v1727 = vpow.pop %v1726
    %v1728 = vmul.f32 %v1684, 1.442695
    %v1729 = vpow.pop %v1728
    %v1730 = vmul.f32 %v1685, 1.442695
    %v1731 = vpow.pop %v1730
    %v1732 = vmul.f32 %v1686, 1.442695
    %v1733 = vpow.pop %v1732
    %v1734 = vmul.f32 %v1687, 1.442695
    %v1735 = vpow.pop %v1734
    %v1736 = vmul.f32 %v1688, 1.442695
    %v1737 = vpow.pop %v1736
    %v1738 = vmul.f32 %v1689, 1.442695
    %v1739 = vpow.pop %v1738
    %v1740 = vmul.f32 %v1690, 1.442695
    %v1741 = vpow.pop %v1740
    %v1742 = vmul.f32 %v1691, 1.442695
    %v1743 = vpow.pop %v1742
    %v1744 = vmul.f32 %v1692, 1.442695
    %v1745 = vpow.pop %v1744
    %v1746 = vmul.f32 %v1693, 1.442695
    %v1747 = vpow.pop %v1746
    %v1748 = vmul.f32 %v1694, 1.442695
    %v1749 = vpow.pop %v1748
    %v1750 = vmul.f32 %v1695, 1.442695
    %v1751 = vpow.pop %v1750
    %v1752 = vmul.f32 %v1696, 1.442695
    %v1753 = vpow.pop %v1752
    %v1754 = vmul.f32 %v1697, 1.442695
    %v1755 = vpow.pop %v1754
    %v1756 = vmul.f32 %v1698, 1.442695
    %v1757 = vpow.pop %v1756
    %v1758 = vmul.f32 %v1699, 1.442695
    %v1759 = vpow.pop %v1758
    %v1760 = vmul.f32 %v1700, 1.442695
    %v1761 = vpow.pop %v1760
    %v1762 = vmul.f32 %v1701, 1.442695
    %v1763 = vpow.pop %v1762
    %v1764 = vmul.f32 %v1702, 1.442695
    %v1765 = vpow.pop %v1764
    %v1766 = vmul.f32 %v1703, 1.442695
    %v1767 = vpow.pop %v1766
    %v1768 = vadd.f32 %v1705, 1.0
    %v1769 = vadd.f32 %v1707, 1.0
    %v1770 = vadd.f32 %v1709, 1.0
    %v1771 = vadd.f32 %v1711, 1.0
    %v1772 = vadd.f32 %v1713, 1.0
    %v1773 = vadd.f32 %v1715, 1.0
    %v1774 = vadd.f32 %v1717, 1.0
    %v1775 = vadd.f32 %v1719, 1.0
    %v1776 = vadd.f32 %v1721, 1.0
    %v1777 = vadd.f32 %v1723, 1.0
    %v1778 = vadd.f32 %v1725, 1.0
    %v1779 = vadd.f32 %v1727, 1.0
    %v1780 = vadd.f32 %v1729, 1.0
    %v1781 = vadd.f32 %v1731, 1.0
    %v1782 = vadd.f32 %v1733, 1.0
    %v1783 = vadd.f32 %v1735, 1.0
    %v1784 = vadd.f32 %v1737, 1.0
    %v1785 = vadd.f32 %v1739, 1.0
    %v1786 = vadd.f32 %v1741, 1.0
    %v1787 = vadd.f32 %v1743, 1.0
    %v1788 = vadd.f32 %v1745, 1.0
    %v1789 = vadd.f32 %v1747, 1.0
    %v1790 = vadd.f32 %v1749, 1.0
    %v1791 = vadd.f32 %v1751, 1.0
    %v1792 = vadd.f32 %v1753, 1.0
    %v1793 = vadd.f32 %v1755, 1.0
    %v1794 = vadd.f32 %v1757, 1.0
    %v1795 = vadd.f32 %v1759, 1.0
    %v1796 = vadd.f32 %v1761, 1.0
    %v1797 = vadd.f32 %v1763, 1.0
    %v1798 = vadd.f32 %v1765, 1.0
    %v1799 = vadd.f32 %v1767, 1.0
    %v1800 = vrcp.pop %v1768
    %v1801 = vrcp.pop %v1769
    %v1802 = vrcp.pop %v1770
    %v1803 = vrcp.pop %v1771
    %v1804 = vrcp.pop %v1772
    %v1805 = vrcp.pop %v1773
    %v1806 = vrcp.pop %v1774
    %v1807 = vrcp.pop %v1775
    %v1808 = vrcp.pop %v1776
    %v1809 = vrcp.pop %v1777
    %v1810 = vrcp.pop %v1778
    %v1811 = vrcp.pop %v1779
    %v1812 = vrcp.pop %v1780
    %v1813 = vrcp.pop %v1781
    %v1814 = vrcp.pop %v1782
    %v1815 = vrcp.pop %v1783
    %v1816 = vrcp.pop %v1784
    %v1817 = vrcp.pop %v1785
    %v1818 = vrcp.pop %v1786
    %v1819 = vrcp.pop %v1787
    %v1820 = vrcp.pop %v1788
    %v1821 = vrcp.pop %v1789
    %v1822 = vrcp.pop %v1790
    %v1823 = vrcp.pop %v1791
    %v1824 = vrcp.pop %v1792
    %v1825 = vrcp.pop %v1793
    %v1826 = vrcp.pop %v1794
    %v1827 = vrcp.pop %v1795
    %v1828 = vrcp.pop %v1796
    %v1829 = vrcp.pop %v1797
    %v1830 = vrcp.pop %v1798
    %v1831 = vrcp.pop %v1799
    %v1832 = vmul.f32 %v1305, %v1800
    %v1833 = vmul.f32 %v1421, %v1801
    %v1834 = vmul.f32 %v1537, %v1802
    %v1835 = vmul.f32 %v1653, %v1803
    %v1836 = vmul.f32 %v1307, %v1804
    %v1837 = vmul.f32 %v1423, %v1805
    %v1838 = vmul.f32 %v1539, %v1806
    %v1839 = vmul.f32 %v1655, %v1807
    %v1840 = vmul.f32 %v1310, %v1808
    %v1841 = vmul.f32 %v1426, %v1809
    %v1842 = vmul.f32 %v1542, %v1810
    %v1843 = vmul.f32 %v1658, %v1811
    %v1844 = vmul.f32 %v1312, %v1812
    %v1845 = vmul.f32 %v1428, %v1813
    %v1846 = vmul.f32 %v1544, %v1814
    %v1847 = vmul.f32 %v1660, %v1815
    %v1848 = vmul.f32 %v1315, %v1816
    %v1849 = vmul.f32 %v1431, %v1817
    %v1850 = vmul.f32 %v1547, %v1818
    %v1851 = vmul.f32 %v1663, %v1819
    %v1852 = vmul.f32 %v1317, %v1820
    %v1853 = vmul.f32 %v1433, %v1821
    %v1854 = vmul.f32 %v1549, %v1822
    %v1855 = vmul.f32 %v1665, %v1823
    %v1856 = vmul.f32 %v1320, %v1824
    %v1857 = vmul.f32 %v1436, %v1825
    %v1858 = vmul.f32 %v1552, %v1826
    %v1859 = vmul.f32 %v1668, %v1827
    %v1860 = vmul.f32 %v1322, %v1828
    %v1861 = vmul.f32 %v1438, %v1829
    %v1862 = vmul.f32 %v1554, %v1830
    %v1863 = vmul.f32 %v1670, %v1831
    %v1864 = vpack.c.bf16 %v1836, %v1832
    %v1865 = vpack.c.bf16 %v1837, %v1833
    %v1866 = vpack.c.bf16 %v1838, %v1834
    %v1867 = vpack.c.bf16 %v1839, %v1835
    %v1868 = vpack.c.bf16 %v1844, %v1840
    %v1869 = vpack.c.bf16 %v1845, %v1841
    %v1870 = vpack.c.bf16 %v1846, %v1842
    %v1871 = vpack.c.bf16 %v1847, %v1843
    %v1872 = vpack.c.bf16 %v1852, %v1848
    %v1873 = vpack.c.bf16 %v1853, %v1849
    %v1874 = vpack.c.bf16 %v1854, %v1850
    %v1875 = vpack.c.bf16 %v1855, %v1851
    %v1876 = vpack.c.bf16 %v1860, %v1856
    %v1877 = vpack.c.bf16 %v1861, %v1857
    %v1878 = vpack.c.bf16 %v1862, %v1858
    %v1879 = vpack.c.bf16 %v1863, %v1859
    %v1880 = vld [vmem:[%s5] sm:$0xf]
    %v1881 = vld [vmem:[%s5 + $0x4] sm:$0xf]
    %v1882 = vld [vmem:[%s5 + $0x8] sm:$0xf]
    %v1883 = vld [vmem:[%s5 + $0xc] sm:$0xf]
    %v1884 = vld [vmem:[%s5 + $0x10] sm:$0xf]
    %v1885 = vld [vmem:[%s5 + $0x14] sm:$0xf]
    %v1886 = vld [vmem:[%s5 + $0x18] sm:$0xf]
    %v1887 = vld [vmem:[%s5 + $0x1c] sm:$0xf]
    %v1888 = vld [vmem:[%s5 + $0x20] sm:$0xf]
    %v1889 = vld [vmem:[%s5 + $0x24] sm:$0xf]
    %v1890 = vld [vmem:[%s5 + $0x28] sm:$0xf]
    %v1891 = vld [vmem:[%s5 + $0x2c] sm:$0xf]
    %v1892 = vld [vmem:[%s5 + $0x30] sm:$0xf]
    %v1893 = vld [vmem:[%s5 + $0x34] sm:$0xf]
    %v1894 = vld [vmem:[%s5 + $0x38] sm:$0xf]
    %v1895 = vld [vmem:[%s5 + $0x3c] sm:$0xf]
    %v1896 = vld [vmem:[%s5 + $0x40] sm:$0xf]
    %v1897 = vld [vmem:[%s5 + $0x44] sm:$0xf]
    %v1898 = vld [vmem:[%s5 + $0x48] sm:$0xf]
    %v1899 = vld [vmem:[%s5 + $0x4c] sm:$0xf]
    %v1900 = vld [vmem:[%s5 + $0x50] sm:$0xf]
    %v1901 = vld [vmem:[%s5 + $0x54] sm:$0xf]
    %v1902 = vld [vmem:[%s5 + $0x58] sm:$0xf]
    %v1903 = vld [vmem:[%s5 + $0x5c] sm:$0xf]
    %v1904 = vld [vmem:[%s5 + $0x60] sm:$0xf]
    %v1905 = vld [vmem:[%s5 + $0x64] sm:$0xf]
    %v1906 = vld [vmem:[%s5 + $0x68] sm:$0xf]
    %v1907 = vld [vmem:[%s5 + $0x6c] sm:$0xf]
    %v1908 = vld [vmem:[%s5 + $0x70] sm:$0xf]
    %v1909 = vld [vmem:[%s5 + $0x74] sm:$0xf]
    %v1910 = vld [vmem:[%s5 + $0x78] sm:$0xf]
    %v1911 = vld [vmem:[%s5 + $0x7c] sm:$0xf]
    %v1912 = vld [vmem:[%s5 + $0x80] sm:$0xf]
    %v1913 = vld [vmem:[%s5 + $0x84] sm:$0xf]
    %v1914 = vld [vmem:[%s5 + $0x88] sm:$0xf]
    %v1915 = vld [vmem:[%s5 + $0x8c] sm:$0xf]
    %v1916 = vld [vmem:[%s5 + $0x90] sm:$0xf]
    %v1917 = vld [vmem:[%s5 + $0x94] sm:$0xf]
    %v1918 = vld [vmem:[%s5 + $0x98] sm:$0xf]
    %v1919 = vld [vmem:[%s5 + $0x9c] sm:$0xf]
    %v1920 = vld [vmem:[%s5 + $0xa0] sm:$0xf]
    %v1921 = vld [vmem:[%s5 + $0xa4] sm:$0xf]
    %v1922 = vld [vmem:[%s5 + $0xa8] sm:$0xf]
    %v1923 = vld [vmem:[%s5 + $0xac] sm:$0xf]
    %v1924 = vld [vmem:[%s5 + $0xb0] sm:$0xf]
    %v1925 = vld [vmem:[%s5 + $0xb4] sm:$0xf]
    %v1926 = vld [vmem:[%s5 + $0xb8] sm:$0xf]
    %v1927 = vld [vmem:[%s5 + $0xbc] sm:$0xf]
    %v1928 = vld [vmem:[%s5 + $0xc0] sm:$0xf]
    %v1929 = vld [vmem:[%s5 + $0xc4] sm:$0xf]
    %v1930 = vld [vmem:[%s5 + $0xc8] sm:$0xf]
    %v1931 = vld [vmem:[%s5 + $0xcc] sm:$0xf]
    %v1932 = vld [vmem:[%s5 + $0xd0] sm:$0xf]
    %v1933 = vld [vmem:[%s5 + $0xd4] sm:$0xf]
    %v1934 = vld [vmem:[%s5 + $0xd8] sm:$0xf]
    %v1935 = vld [vmem:[%s5 + $0xdc] sm:$0xf]
    %v1936 = vld [vmem:[%s5 + $0xe0] sm:$0xf]
    %v1937 = vld [vmem:[%s5 + $0xe4] sm:$0xf]
    %v1938 = vld [vmem:[%s5 + $0xe8] sm:$0xf]
    %v1939 = vld [vmem:[%s5 + $0xec] sm:$0xf]
    %v1940 = vld [vmem:[%s5 + $0xf0] sm:$0xf]
    %v1941 = vld [vmem:[%s5 + $0xf4] sm:$0xf]
    %v1942 = vld [vmem:[%s5 + $0xf8] sm:$0xf]
    %v1943 = vld [vmem:[%s5 + $0xfc] sm:$0xf]
    %v1944 = vld [vmem:[%s6] sm:$0x1]
    %v1946 = vperm.slane %v1944, 0
    %v2012 = vunpack.c.l.b16 %v1880
    %v2013 = vunpack.c.l.b16 %v1881
    %v2014 = vunpack.c.l.b16 %v1882
    %v2015 = vunpack.c.l.b16 %v1883
    %v2016 = vunpack.c.l.b16 %v1884
    %v2017 = vunpack.c.l.b16 %v1885
    %v2018 = vunpack.c.l.b16 %v1886
    %v2019 = vunpack.c.l.b16 %v1887
    %v2020 = vunpack.c.l.b16 %v1888
    %v2021 = vunpack.c.l.b16 %v1889
    %v2022 = vunpack.c.l.b16 %v1890
    %v2023 = vunpack.c.l.b16 %v1891
    %v2024 = vunpack.c.l.b16 %v1892
    %v2025 = vunpack.c.l.b16 %v1893
    %v2026 = vunpack.c.l.b16 %v1894
    %v2027 = vunpack.c.l.b16 %v1895
    %v2028 = vunpack.c.l.b16 %v1896
    %v2029 = vunpack.c.l.b16 %v1897
    %v2030 = vunpack.c.l.b16 %v1898
    %v2031 = vunpack.c.l.b16 %v1899
    %v2032 = vunpack.c.l.b16 %v1900
    %v2033 = vunpack.c.l.b16 %v1901
    %v2034 = vunpack.c.l.b16 %v1902
    %v2035 = vunpack.c.l.b16 %v1903
    %v2036 = vunpack.c.l.b16 %v1904
    %v2037 = vunpack.c.l.b16 %v1905
    %v2038 = vunpack.c.l.b16 %v1906
    %v2039 = vunpack.c.l.b16 %v1907
    %v2040 = vunpack.c.l.b16 %v1908
    %v2041 = vunpack.c.l.b16 %v1909
    %v2042 = vunpack.c.l.b16 %v1910
    %v2043 = vunpack.c.l.b16 %v1911
    %v2044 = vunpack.c.l.b16 %v1912
    %v2045 = vunpack.c.l.b16 %v1913
    %v2046 = vunpack.c.l.b16 %v1914
    %v2047 = vunpack.c.l.b16 %v1915
    %v2048 = vunpack.c.l.b16 %v1916
    %v2049 = vunpack.c.l.b16 %v1917
    %v2050 = vunpack.c.l.b16 %v1918
    %v2051 = vunpack.c.l.b16 %v1919
    %v2052 = vunpack.c.l.b16 %v1920
    %v2053 = vunpack.c.l.b16 %v1921
    %v2054 = vunpack.c.l.b16 %v1922
    %v2055 = vunpack.c.l.b16 %v1923
    %v2056 = vunpack.c.l.b16 %v1924
    %v2057 = vunpack.c.l.b16 %v1925
    %v2058 = vunpack.c.l.b16 %v1926
    %v2059 = vunpack.c.l.b16 %v1927
    %v2060 = vunpack.c.l.b16 %v1928
    %v2061 = vunpack.c.l.b16 %v1929
    %v2062 = vunpack.c.l.b16 %v1930
    %v2063 = vunpack.c.l.b16 %v1931
    %v2064 = vunpack.c.l.b16 %v1932
    %v2065 = vunpack.c.l.b16 %v1933
    %v2066 = vunpack.c.l.b16 %v1934
    %v2067 = vunpack.c.l.b16 %v1935
    %v2068 = vunpack.c.l.b16 %v1936
    %v2069 = vunpack.c.l.b16 %v1937
    %v2070 = vunpack.c.l.b16 %v1938
    %v2071 = vunpack.c.l.b16 %v1939
    %v2072 = vunpack.c.l.b16 %v1940
    %v2073 = vunpack.c.l.b16 %v1941
    %v2074 = vunpack.c.l.b16 %v1942
    %v2075 = vunpack.c.l.b16 %v1943
    %v2076 = vpack.c.b16 %v2013, %v2012
    %v2077 = vpack.c.b16 %v2015, %v2014
    %v2078 = vpack.c.b16 %v2017, %v2016
    %v2079 = vpack.c.b16 %v2019, %v2018
    %v2080 = vpack.c.b16 %v2021, %v2020
    %v2081 = vpack.c.b16 %v2023, %v2022
    %v2082 = vpack.c.b16 %v2025, %v2024
    %v2083 = vpack.c.b16 %v2027, %v2026
    %v2084 = vpack.c.b16 %v2029, %v2028
    %v2085 = vpack.c.b16 %v2031, %v2030
    %v2086 = vpack.c.b16 %v2033, %v2032
    %v2087 = vpack.c.b16 %v2035, %v2034
    %v2088 = vpack.c.b16 %v2037, %v2036
    %v2089 = vpack.c.b16 %v2039, %v2038
    %v2090 = vpack.c.b16 %v2041, %v2040
    %v2091 = vpack.c.b16 %v2043, %v2042
    %v2092 = vpack.c.b16 %v2045, %v2044
    %v2093 = vpack.c.b16 %v2047, %v2046
    %v2094 = vpack.c.b16 %v2049, %v2048
    %v2095 = vpack.c.b16 %v2051, %v2050
    %v2096 = vpack.c.b16 %v2053, %v2052
    %v2097 = vpack.c.b16 %v2055, %v2054
    %v2098 = vpack.c.b16 %v2057, %v2056
    %v2099 = vpack.c.b16 %v2059, %v2058
    %v2100 = vpack.c.b16 %v2061, %v2060
    %v2101 = vpack.c.b16 %v2063, %v2062
    %v2102 = vpack.c.b16 %v2065, %v2064
    %v2103 = vpack.c.b16 %v2067, %v2066
    %v2104 = vpack.c.b16 %v2069, %v2068
    %v2105 = vpack.c.b16 %v2071, %v2070
    %v2106 = vpack.c.b16 %v2073, %v2072
    %v2107 = vpack.c.b16 %v2075, %v2074
    %2140 = vmatpush.bf16.msra.mxu0 %v2083
    %2141 = vmatpush.bf16.msra.mxu0 %v2082
    %2142 = vmatpush.bf16.msra.mxu0 %v2081
    %2143 = vmatpush.bf16.msra.mxu0 %v2080
    %2144 = vmatpush.bf16.msra.mxu0 %v2079
    %2145 = vmatpush.bf16.msra.mxu0 %v2078
    %2146 = vmatpush.bf16.msra.mxu0 %v2077
    %2147 = vmatpush.bf16.msra.mxu0 %v2076
    %2148 = vmatmul.bf16.gmra.mxu0 %v1864
    %v2149 = vpop.f32.mrf.mxu0
    %v2150 = vadd.f32 %v1946, %v2149
    %v2151 = vpop.f32.mrf.mxu0
    %v2152 = vadd.f32 %v1946, %v2151
    %2153 = vmatmul.bf16.gmra.mxu0 %v1868
    %v2154 = vpop.f32.mrf.mxu0
    %v2155 = vadd.f32 %v1946, %v2154
    %v2156 = vpop.f32.mrf.mxu0
    %v2157 = vadd.f32 %v1946, %v2156
    %2158 = vmatmul.bf16.gmra.mxu0 %v1872
    %v2159 = vpop.f32.mrf.mxu0
    %v2160 = vadd.f32 %v1946, %v2159
    %v2161 = vpop.f32.mrf.mxu0
    %v2162 = vadd.f32 %v1946, %v2161
    %2163 = vmatmul.bf16.gmra.mxu0 %v1876
    %v2164 = vpop.f32.mrf.mxu0
    %v2165 = vadd.f32 %v1946, %v2164
    %v2166 = vpop.f32.mrf.mxu0
    %v2167 = vadd.f32 %v1946, %v2166
    %2168 = vdwg.mxu0
    %2169 = vmatpush.bf16.msra.mxu0 %v2091
    %2170 = vmatpush.bf16.msra.mxu0 %v2090
    %2171 = vmatpush.bf16.msra.mxu0 %v2089
    %2172 = vmatpush.bf16.msra.mxu0 %v2088
    %2173 = vmatpush.bf16.msra.mxu0 %v2087
    %2174 = vmatpush.bf16.msra.mxu0 %v2086
    %2175 = vmatpush.bf16.msra.mxu0 %v2085
    %2176 = vmatpush.bf16.msra.mxu0 %v2084
    %2177 = vmatmul.bf16.gmra.mxu0 %v1865
    %v2178 = vpop.f32.mrf.mxu0
    %v2179 = vadd.f32 %v2150, %v2178
    %v2180 = vpop.f32.mrf.mxu0
    %v2181 = vadd.f32 %v2152, %v2180
    %2182 = vmatmul.bf16.gmra.mxu0 %v1869
    %v2183 = vpop.f32.mrf.mxu0
    %v2184 = vadd.f32 %v2155, %v2183
    %v2185 = vpop.f32.mrf.mxu0
    %v2186 = vadd.f32 %v2157, %v2185
    %2187 = vmatmul.bf16.gmra.mxu0 %v1873
    %v2188 = vpop.f32.mrf.mxu0
    %v2189 = vadd.f32 %v2160, %v2188
    %v2190 = vpop.f32.mrf.mxu0
    %v2191 = vadd.f32 %v2162, %v2190
    %2192 = vmatmul.bf16.gmra.mxu0 %v1877
    %v2193 = vpop.f32.mrf.mxu0
    %v2194 = vadd.f32 %v2165, %v2193
    %v2195 = vpop.f32.mrf.mxu0
    %v2196 = vadd.f32 %v2167, %v2195
    %2197 = vdwg.mxu0
    %2198 = vmatpush.bf16.msra.mxu0 %v2099
    %2199 = vmatpush.bf16.msra.mxu0 %v2098
    %2200 = vmatpush.bf16.msra.mxu0 %v2097
    %2201 = vmatpush.bf16.msra.mxu0 %v2096
    %2202 = vmatpush.bf16.msra.mxu0 %v2095
    %2203 = vmatpush.bf16.msra.mxu0 %v2094
    %2204 = vmatpush.bf16.msra.mxu0 %v2093
    %2205 = vmatpush.bf16.msra.mxu0 %v2092
    %2206 = vmatmul.bf16.gmra.mxu0 %v1866
    %v2207 = vpop.f32.mrf.mxu0
    %v2208 = vadd.f32 %v2179, %v2207
    %v2209 = vpop.f32.mrf.mxu0
    %v2210 = vadd.f32 %v2181, %v2209
    %2211 = vmatmul.bf16.gmra.mxu0 %v1870
    %v2212 = vpop.f32.mrf.mxu0
    %v2213 = vadd.f32 %v2184, %v2212
    %v2214 = vpop.f32.mrf.mxu0
    %v2215 = vadd.f32 %v2186, %v2214
    %2216 = vmatmul.bf16.gmra.mxu0 %v1874
    %v2217 = vpop.f32.mrf.mxu0
    %v2218 = vadd.f32 %v2189, %v2217
    %v2219 = vpop.f32.mrf.mxu0
    %v2220 = vadd.f32 %v2191, %v2219
    %2221 = vmatmul.bf16.gmra.mxu0 %v1878
    %v2222 = vpop.f32.mrf.mxu0
    %v2223 = vadd.f32 %v2194, %v2222
    %v2224 = vpop.f32.mrf.mxu0
    %v2225 = vadd.f32 %v2196, %v2224
    %2226 = vdwg.mxu0
    %2227 = vmatpush.bf16.msra.mxu0 %v2107
    %2228 = vmatpush.bf16.msra.mxu0 %v2106
    %2229 = vmatpush.bf16.msra.mxu0 %v2105
    %2230 = vmatpush.bf16.msra.mxu0 %v2104
    %2231 = vmatpush.bf16.msra.mxu0 %v2103
    %2232 = vmatpush.bf16.msra.mxu0 %v2102
    %2233 = vmatpush.bf16.msra.mxu0 %v2101
    %2234 = vmatpush.bf16.msra.mxu0 %v2100
    %2235 = vmatmul.bf16.gmra.mxu0 %v1867
    %v2236 = vpop.f32.mrf.mxu0
    %v2237 = vadd.f32 %v2208, %v2236
    %v2238 = vpop.f32.mrf.mxu0
    %v2239 = vadd.f32 %v2210, %v2238
    %2240 = vmatmul.bf16.gmra.mxu0 %v1871
    %v2241 = vpop.f32.mrf.mxu0
    %v2242 = vadd.f32 %v2213, %v2241
    %v2243 = vpop.f32.mrf.mxu0
    %v2244 = vadd.f32 %v2215, %v2243
    %2245 = vmatmul.bf16.gmra.mxu0 %v1875
    %v2246 = vpop.f32.mrf.mxu0
    %v2247 = vadd.f32 %v2218, %v2246
    %v2248 = vpop.f32.mrf.mxu0
    %v2249 = vadd.f32 %v2220, %v2248
    %2250 = vmatmul.bf16.gmra.mxu0 %v1879
    %v2251 = vpop.f32.mrf.mxu0
    %v2252 = vadd.f32 %v2223, %v2251
    %v2253 = vpop.f32.mrf.mxu0
    %v2254 = vadd.f32 %v2225, %v2253
    %2255 = vdwg.mxu0
    %v2256 = vlaneseq
    %v2257 = vand.u32 %v2256, 127
    %vm2258 = vcmp.ge.s32.totalorder %v2257, 4
    %vm2259 = vcmp.lt.s32.totalorder %v2257, 8
    %vm2260 = vmand %vm2258, %vm2259
    %v2261 = vmul.f32 %v2237, 1.442695
    %v2262 = vpow.pop %v2261
    %v2263 = vmul.f32 %v2239, 1.442695
    %v2264 = vpow.pop %v2263
    %v2265 = vmul.f32 %v2242, 1.442695
    %v2266 = vpow.pop %v2265
    %v2267 = vmul.f32 %v2244, 1.442695
    %v2268 = vpow.pop %v2267
    %v2269 = vmul.f32 %v2247, 1.442695
    %v2270 = vpow.pop %v2269
    %v2271 = vmul.f32 %v2249, 1.442695
    %v2272 = vpow.pop %v2271
    %v2273 = vmul.f32 %v2252, 1.442695
    %v2274 = vpow.pop %v2273
    %v2275 = vmul.f32 %v2254, 1.442695
    %v2276 = vpow.pop %v2275
    %v2277 = vsel %vm2260, %v2262, %v2237
    %v2278 = vsel %vm2260, %v2264, %v2239
    %v2279 = vsel %vm2260, %v2266, %v2242
    %v2280 = vsel %vm2260, %v2268, %v2244
    %v2281 = vsel %vm2260, %v2270, %v2247
    %v2282 = vsel %vm2260, %v2272, %v2249
    %v2283 = vsel %vm2260, %v2274, %v2252
    %v2284 = vsel %vm2260, %v2276, %v2254
    %vm2285 = vcmask 64512
    %2286 = vst.msk [vmem:[%s7] sm:$0xff] %vm2285, %v2277
    %2287 = vst.msk [vmem:[%s7 + $0x8] sm:$0xff] %vm2285, %v2278
    %2288 = vst.msk [vmem:[%s7 + $0x10] sm:$0xff] %vm2285, %v2279
    %2289 = vst.msk [vmem:[%s7 + $0x18] sm:$0xff] %vm2285, %v2280
    %2290 = vst.msk [vmem:[%s7 + $0x20] sm:$0xff] %vm2285, %v2281
    %2291 = vst.msk [vmem:[%s7 + $0x28] sm:$0xff] %vm2285, %v2282
    %2292 = vst.msk [vmem:[%s7 + $0x30] sm:$0xff] %vm2285, %v2283
    %2293 = vst.msk [vmem:[%s7 + $0x38] sm:$0xff] %vm2285, %v2284
    // Predicated region
    $region34: #{p_forward.1} parent=1 // pred_check
      _
    $region35: #{p_forward.1} parent=1 // pred_check_branch
      %2295 = sbr.rel (0) target = $region37
    $region36: #{p_forward.1} parent=1 // pred_region
      _
    $region37: #{p_forward.1} parent=1 // pred_fallthru
      _
    // Predicated region
    $region38: #{p_forward.1} parent=1 // pred_check
      _
    $region39: #{p_forward.1} parent=1 // pred_check_branch
      %2297 = sbr.rel (0) target = $region41
    $region40: #{p_forward.1} parent=1 // pred_region
      _
    $region41: #{p_forward.1} parent=1 // pred_fallthru
      _
    %2298 = vsyncpa [#allocation3], 1

</llo_original>
